<compile_context>
chip_gen: v5e
topology: v5e:2x2
jax: 0.10.0
libtpu: 0.0.40
codegen_flags: <defaults>
</compile_context>

<pallas_src>
import jax
import jax.numpy as jnp
from jax.experimental import pallas as pl
from jax.experimental.pallas import tpu as pltpu

COMPUTE_DTYPE = jnp.bfloat16   # MXU operand dtype; accumulation is f32
LANE = 128


def _round_up(x, m):
    return (x + m - 1) // m * m


def _input_block_kernel(x_ref, w1_ref, b1_ref, w2_ref, b2_ref, o_ref, mid_ref):
    """One batch element: conv1(3x3)+bias -> ReLU -> conv2(3x3)+bias.

    x_ref:   (1, H+2, W+2, Cin)   f32, spatially pre-padded input
    w1_ref:  (9*Cin, Cmid)        bf16, im2col-reshaped conv1 weights
    b1_ref:  (1, Cmid)            f32
    w2_ref:  (9*Cmid, Cout_p)     bf16, im2col-reshaped conv2 weights (padded)
    b2_ref:  (1, Cout_p)          f32 (zero padded)
    o_ref:   (1, H*W, Cout_p)     f32, lane-dense output tile
    mid_ref: (H+2, W+2, Cmid)     f32 VMEM scratch (zero-bordered conv1 act.)
    """
    Hp, Wp, Cmid = mid_ref.shape
    H, W = Hp - 2, Wp - 2
    Cin = x_ref.shape[3]

    x = x_ref[0]                                            # (H+2, W+2, Cin)

    # ---- conv1: im2col (9 shifted windows concatenated along lanes) then a
    #      single MXU matmul with K = 9*Cin. ----
    p1 = jnp.concatenate(
        [x[ky:ky + H, kx:kx + W, :].reshape(H * W, Cin)
         for ky in range(3) for kx in range(3)],
        axis=-1)                                            # (H*W, 9*Cin)
    acc1 = jnp.dot(p1.astype(w1_ref.dtype), w1_ref[...],
                   preferred_element_type=jnp.float32)      # (H*W, Cmid) f32

    # ---- bias + activation (ReLU), kept in f32 (v5e-safe epilogue) ----
    h1 = jnp.maximum(acc1 + b1_ref[0], 0.0)

    # ---- stage conv1 activations into the zero-bordered scratch.  Only the
    #      1-pixel border is cleared; the interior is fully overwritten each
    #      grid step.  Done every step so it is correct even when the batch
    #      axis is split across TensorCores (no pl.program_id(0)==0 gate). ----
    zrow = jnp.zeros((1, Wp, Cmid), mid_ref.dtype)
    zcol = jnp.zeros((Hp, 1, Cmid), mid_ref.dtype)
    mid_ref[0:1, :, :] = zrow
    mid_ref[Hp - 1:Hp, :, :] = zrow
    mid_ref[:, 0:1, :] = zcol
    mid_ref[:, Wp - 1:Wp, :] = zcol
    mid_ref[1:H + 1, 1:W + 1, :] = h1.reshape(H, W, Cmid)

    # ---- conv2: same im2col trick, K = 9*Cmid, N = Cout_p (lane dense). ----
    m = mid_ref[...]                                        # (H+2, W+2, Cmid)
    p2 = jnp.concatenate(
        [m[ky:ky + H, kx:kx + W, :].reshape(H * W, Cmid)
         for ky in range(3) for kx in range(3)],
        axis=-1)                                            # (H*W, 9*Cmid)
    acc2 = jnp.dot(p2.astype(w2_ref.dtype), w2_ref[...],
                   preferred_element_type=jnp.float32)      # (H*W, Cout_p)

    # Lane-dense, unmasked store: Cout_p is a multiple of 128.
    o_ref[0] = (acc2 + b2_ref[0]).astype(o_ref.dtype)


@jax.jit
def input_block_forward(x_nchw, w1, b1, w2, b2):
    """InputBlock forward.  x_nchw: (N, Cin, H, W) f32 -> (N, Cout, H, W)."""
    N, Cin, H, W = x_nchw.shape
    Cmid = w1.shape[-1]
    Cout = w2.shape[-1]
    Cout_p = _round_up(Cout, LANE)   # lane-dense output columns (MXU-free pad)

    # layout glue: NCHW -> NHWC, spatial pad=1 for the 3x3 convs.
    x = jnp.transpose(x_nchw, (0, 2, 3, 1))
    xp = jnp.pad(x, ((0, 0), (1, 1), (1, 1), (0, 0)))

    # im2col weight layout: (3,3,C,K) -> (9*C, K); row index (ky*3+kx)*C + c
    # matches the patch concatenation order inside the kernel.
    w1_2d = w1.reshape(9 * Cin, Cmid).astype(COMPUTE_DTYPE)
    w2_2d = jnp.pad(w2.reshape(9 * Cmid, Cout),
                    ((0, 0), (0, Cout_p - Cout))).astype(COMPUTE_DTYPE)
    b1_2d = b1.reshape(1, Cmid).astype(jnp.float32)
    b2_2d = jnp.pad(b2, (0, Cout_p - Cout)).reshape(1, Cout_p).astype(jnp.float32)

    flops = 2 * N * H * W * 9 * (Cin * Cmid + Cmid * Cout_p)
    bytes_accessed = (xp.size * 4 + w1_2d.size * 2 + w2_2d.size * 2
                      + (Cmid + Cout_p) * 4 + N * H * W * Cout_p * 4)

    out_flat = pl.pallas_call(
        _input_block_kernel,
        out_shape=jax.ShapeDtypeStruct((N, H * W, Cout_p), x_nchw.dtype),
        grid_spec=pltpu.PrefetchScalarGridSpec(
            num_scalar_prefetch=0,
            grid=(N,),
            in_specs=[
                pl.BlockSpec((1, H + 2, W + 2, Cin), lambda b: (b, 0, 0, 0)),
                pl.BlockSpec((9 * Cin, Cmid), lambda b: (0, 0)),
                pl.BlockSpec((1, Cmid), lambda b: (0, 0)),
                pl.BlockSpec((9 * Cmid, Cout_p), lambda b: (0, 0)),
                pl.BlockSpec((1, Cout_p), lambda b: (0, 0)),
            ],
            out_specs=pl.BlockSpec((1, H * W, Cout_p), lambda b: (b, 0, 0)),
            scratch_shapes=[pltpu.VMEM((H + 2, W + 2, Cmid), jnp.float32)],
        ),
        compiler_params=pltpu.CompilerParams(
            dimension_semantics=("parallel",)),
        cost_estimate=pl.CostEstimate(flops=flops, transcendentals=0,
                                      bytes_accessed=bytes_accessed),
    )(xp, w1_2d, b1_2d, w2_2d, b2_2d)

    # drop the lane padding (free reshape + one fused slice/transpose pass).
    out = out_flat.reshape(N, H, W, Cout_p)[..., :Cout]
    return jnp.transpose(out, (0, 3, 1, 2))                 # back to NCHW


def _reference_forward(x_nchw, w1, b1, w2, b2):
    """Pure-JAX reference (lax.conv) mirroring the kernel's bf16/f32 mix."""
    cd = COMPUTE_DTYPE
    x = jnp.transpose(x_nchw, (0, 2, 3, 1)).astype(cd)
    dn = jax.lax.conv_dimension_numbers(x.shape, w1.shape,
                                        ("NHWC", "HWIO", "NHWC"))
    h = jax.lax.conv_general_dilated(
        x, w1.astype(cd), (1, 1), "SAME", dimension_numbers=dn,
        preferred_element_type=jnp.float32) + b1
    h = jnp.maximum(h, 0.0).astype(cd)
    dn2 = jax.lax.conv_dimension_numbers(h.shape, w2.shape,
                                         ("NHWC", "HWIO", "NHWC"))
    o = jax.lax.conv_general_dilated(
        h, w2.astype(cd), (1, 1), "SAME", dimension_numbers=dn2,
        preferred_element_type=jnp.float32) + b2
    return jnp.transpose(o, (0, 3, 1, 2))


if __name__ == "__main__":
    # Small, deterministic shapes: N=2, Cin=4, Cmid=8, Cout=8, H=W=16.
    N, Cin, Cmid, Cout, H, W = 2, 4, 8, 8, 16, 16

    key = jax.random.PRNGKey(0)
    k_x, k_w1, k_b1, k_w2, k_b2 = jax.random.split(key, 5)

    x = jax.random.normal(k_x, (N, Cin, H, W), dtype=jnp.float32)
    # HWIO weight layout (PyTorch OIHW would be transposed (2,3,1,0) to this).
    w1 = jax.random.normal(k_w1, (3, 3, Cin, Cmid), dtype=jnp.float32) * 0.1
    b1 = jax.random.normal(k_b1, (Cmid,), dtype=jnp.float32) * 0.1
    w2 = jax.random.normal(k_w2, (3, 3, Cmid, Cout), dtype=jnp.float32) * 0.1
    b2 = jax.random.normal(k_b2, (Cout,), dtype=jnp.float32) * 0.1

    out = jax.block_until_ready(input_block_forward(x, w1, b1, w2, b2))
    ref = jax.block_until_ready(_reference_forward(x, w1, b1, w2, b2))

    assert out.shape == (N, Cout, H, W)
    err = float(jnp.max(jnp.abs(out - ref)))
    # bf16 operands / f32 accumulation in both paths; only summation-order and
    # rare bf16 rounding-boundary differences remain (real bugs give >0.1).
    assert err < 1e-2, f"mismatch vs lax.conv reference: {err}"

    print("KERNEL_OK")
</pallas_src>

<mosaic_0001>
module attributes {stable_mosaic.version = 11 : i64} {
  func.func @_input_block_kernel(%arg0: i32, %arg1: memref<1x18x18x4xf32, #tpu.memory_space<vmem>>, %arg2: memref<36x8xbf16, #tpu.memory_space<vmem>>, %arg3: memref<1x8xf32, #tpu.memory_space<vmem>>, %arg4: memref<72x128xbf16, #tpu.memory_space<vmem>>, %arg5: memref<1x128xf32, #tpu.memory_space<vmem>>, %arg6: memref<1x256x128xf32, #tpu.memory_space<vmem>>, %arg7: memref<18x18x8xf32, #tpu.memory_space<vmem>>) attributes {dimension_semantics = [#tpu.dimension_semantics<parallel>], iteration_bounds = array<i64: 2>, scalar_prefetch = 0 : i64, scratch_operands = 1 : i64, tpu.core_type = #tpu.core_type<tc>, window_params = [{transform_indices = @transform_0, window_bounds = array<i64: 1, 18, 18, 4>}, {pipeline_mode = #tpu.pipeline_mode<synchronous>, transform_indices = @transform_1, window_bounds = array<i64: 36, 8>}, {pipeline_mode = #tpu.pipeline_mode<synchronous>, transform_indices = @transform_2, window_bounds = array<i64: 1, 8>}, {pipeline_mode = #tpu.pipeline_mode<synchronous>, transform_indices = @transform_3, window_bounds = array<i64: 72, 128>}, {pipeline_mode = #tpu.pipeline_mode<synchronous>, transform_indices = @transform_4, window_bounds = array<i64: 1, 128>}, {transform_indices = @transform_5, window_bounds = array<i64: 1, 256, 128>}]} {
    %c0 = arith.constant 0 : index
    %c0_0 = arith.constant 0 : index
    %c0_1 = arith.constant 0 : index
    %c0_2 = arith.constant 0 : index
    %0 = vector.load %arg1[%c0, %c0_0, %c0_1, %c0_2] : memref<1x18x18x4xf32, #tpu.memory_space<vmem>>, vector<1x18x18x4xf32>
    %1 = vector.shape_cast %0 : vector<1x18x18x4xf32> to vector<18x18x4xf32>
    %2 = vector.extract_strided_slice %1 {offsets = [0, 0, 0], sizes = [16, 16, 4], strides = [1, 1, 1]} : vector<18x18x4xf32> to vector<16x16x4xf32>
    %3 = vector.shape_cast %2 : vector<16x16x4xf32> to vector<256x4xf32>
    %4 = vector.extract_strided_slice %1 {offsets = [0, 1, 0], sizes = [16, 16, 4], strides = [1, 1, 1]} : vector<18x18x4xf32> to vector<16x16x4xf32>
    %5 = vector.shape_cast %4 : vector<16x16x4xf32> to vector<256x4xf32>
    %6 = vector.extract_strided_slice %1 {offsets = [0, 2, 0], sizes = [16, 16, 4], strides = [1, 1, 1]} : vector<18x18x4xf32> to vector<16x16x4xf32>
    %7 = vector.shape_cast %6 : vector<16x16x4xf32> to vector<256x4xf32>
    %8 = vector.extract_strided_slice %1 {offsets = [1, 0, 0], sizes = [16, 16, 4], strides = [1, 1, 1]} : vector<18x18x4xf32> to vector<16x16x4xf32>
    %9 = vector.shape_cast %8 : vector<16x16x4xf32> to vector<256x4xf32>
    %10 = vector.extract_strided_slice %1 {offsets = [1, 1, 0], sizes = [16, 16, 4], strides = [1, 1, 1]} : vector<18x18x4xf32> to vector<16x16x4xf32>
    %11 = vector.shape_cast %10 : vector<16x16x4xf32> to vector<256x4xf32>
    %12 = vector.extract_strided_slice %1 {offsets = [1, 2, 0], sizes = [16, 16, 4], strides = [1, 1, 1]} : vector<18x18x4xf32> to vector<16x16x4xf32>
    %13 = vector.shape_cast %12 : vector<16x16x4xf32> to vector<256x4xf32>
    %14 = vector.extract_strided_slice %1 {offsets = [2, 0, 0], sizes = [16, 16, 4], strides = [1, 1, 1]} : vector<18x18x4xf32> to vector<16x16x4xf32>
    %15 = vector.shape_cast %14 : vector<16x16x4xf32> to vector<256x4xf32>
    %16 = vector.extract_strided_slice %1 {offsets = [2, 1, 0], sizes = [16, 16, 4], strides = [1, 1, 1]} : vector<18x18x4xf32> to vector<16x16x4xf32>
    %17 = vector.shape_cast %16 : vector<16x16x4xf32> to vector<256x4xf32>
    %18 = vector.extract_strided_slice %1 {offsets = [2, 2, 0], sizes = [16, 16, 4], strides = [1, 1, 1]} : vector<18x18x4xf32> to vector<16x16x4xf32>
    %19 = vector.shape_cast %18 : vector<16x16x4xf32> to vector<256x4xf32>
    %20 = tpu.concatenate %3, %5, %7, %9, %11, %13, %15, %17, %19 in 1 : vector<256x4xf32>, vector<256x4xf32>, vector<256x4xf32>, vector<256x4xf32>, vector<256x4xf32>, vector<256x4xf32>, vector<256x4xf32>, vector<256x4xf32>, vector<256x4xf32> -> vector<256x36xf32>
    %21 = arith.truncf %20 : vector<256x36xf32> to vector<256x36xbf16>
    %c0_3 = arith.constant 0 : index
    %c0_4 = arith.constant 0 : index
    %22 = vector.load %arg2[%c0_3, %c0_4] : memref<36x8xbf16, #tpu.memory_space<vmem>>, vector<36x8xbf16>
    %cst = arith.constant dense<0.000000e+00> : vector<256x8xf32>
    %23 = tpu.matmul %21, %22, %cst {dimension_numbers = #tpu.dot_dimension_numbers<[1], [0], [0], [1], [0, 0, 1, 1], [], []>} : vector<256x36xbf16>, vector<36x8xbf16>, vector<256x8xf32> -> vector<256x8xf32>
    %c0_5 = arith.constant 0 : index
    %c0_6 = arith.constant 0 : index
    %24 = vector.load %arg3[%c0_5, %c0_6] : memref<1x8xf32, #tpu.memory_space<vmem>>, vector<1x8xf32>
    %25 = vector.shape_cast %24 : vector<1x8xf32> to vector<8xf32>
    %26 = vector.shape_cast %25 : vector<8xf32> to vector<1x8xf32>
    %27 = vector.broadcast %26 : vector<1x8xf32> to vector<256x8xf32>
    %28 = arith.addf %23, %27 : vector<256x8xf32>
    %cst_7 = arith.constant 0.000000e+00 : f32
    %29 = vector.broadcast %cst_7 : f32 to vector<256x8xf32>
    %30 = arith.maximumf %28, %29 : vector<256x8xf32>
    %cst_8 = arith.constant 0.000000e+00 : f32
    %31 = vector.broadcast %cst_8 : f32 to vector<1x18x8xf32>
    %cst_9 = arith.constant 0.000000e+00 : f32
    %32 = vector.broadcast %cst_9 : f32 to vector<18x1x8xf32>
    %c0_10 = arith.constant 0 : index
    %c0_11 = arith.constant 0 : index
    %c0_12 = arith.constant 0 : index
    %33 = vector.load %arg7[%c0_10, %c0_11, %c0_12] : memref<18x18x8xf32, #tpu.memory_space<vmem>>, vector<1x18x8xf32>
    tpu.vector_store %arg7[%c0_10, %c0_11, %c0_12], %31 {strides = array<i32>} : memref<18x18x8xf32, #tpu.memory_space<vmem>>, vector<1x18x8xf32>,
    %c17 = arith.constant 17 : index
    %c0_13 = arith.constant 0 : index
    %c0_14 = arith.constant 0 : index
    %34 = vector.load %arg7[%c17, %c0_13, %c0_14] : memref<18x18x8xf32, #tpu.memory_space<vmem>>, vector<1x18x8xf32>
    tpu.vector_store %arg7[%c17, %c0_13, %c0_14], %31 {strides = array<i32>} : memref<18x18x8xf32, #tpu.memory_space<vmem>>, vector<1x18x8xf32>,
    %c0_15 = arith.constant 0 : index
    %c0_16 = arith.constant 0 : index
    %c0_17 = arith.constant 0 : index
    %35 = vector.load %arg7[%c0_15, %c0_16, %c0_17] : memref<18x18x8xf32, #tpu.memory_space<vmem>>, vector<18x1x8xf32>
    tpu.vector_store %arg7[%c0_15, %c0_16, %c0_17], %32 {strides = array<i32>} : memref<18x18x8xf32, #tpu.memory_space<vmem>>, vector<18x1x8xf32>,
    %c0_18 = arith.constant 0 : index
    %c17_19 = arith.constant 17 : index
    %c0_20 = arith.constant 0 : index
    %36 = vector.load %arg7[%c0_18, %c17_19, %c0_20] : memref<18x18x8xf32, #tpu.memory_space<vmem>>, vector<18x1x8xf32>
    tpu.vector_store %arg7[%c0_18, %c17_19, %c0_20], %32 {strides = array<i32>} : memref<18x18x8xf32, #tpu.memory_space<vmem>>, vector<18x1x8xf32>,
    %37 = vector.shape_cast %30 : vector<256x8xf32> to vector<16x16x8xf32>
    %c1 = arith.constant 1 : index
    %c1_21 = arith.constant 1 : index
    %c0_22 = arith.constant 0 : index
    %38 = vector.load %arg7[%c1, %c1_21, %c0_22] : memref<18x18x8xf32, #tpu.memory_space<vmem>>, vector<16x16x8xf32>
    tpu.vector_store %arg7[%c1, %c1_21, %c0_22], %37 {strides = array<i32>} : memref<18x18x8xf32, #tpu.memory_space<vmem>>, vector<16x16x8xf32>,
    %c0_23 = arith.constant 0 : index
    %c0_24 = arith.constant 0 : index
    %c0_25 = arith.constant 0 : index
    %39 = vector.load %arg7[%c0_23, %c0_24, %c0_25] : memref<18x18x8xf32, #tpu.memory_space<vmem>>, vector<18x18x8xf32>
    %40 = vector.extract_strided_slice %39 {offsets = [0, 0, 0], sizes = [16, 16, 8], strides = [1, 1, 1]} : vector<18x18x8xf32> to vector<16x16x8xf32>
    %41 = vector.shape_cast %40 : vector<16x16x8xf32> to vector<256x8xf32>
    %42 = vector.extract_strided_slice %39 {offsets = [0, 1, 0], sizes = [16, 16, 8], strides = [1, 1, 1]} : vector<18x18x8xf32> to vector<16x16x8xf32>
    %43 = vector.shape_cast %42 : vector<16x16x8xf32> to vector<256x8xf32>
    %44 = vector.extract_strided_slice %39 {offsets = [0, 2, 0], sizes = [16, 16, 8], strides = [1, 1, 1]} : vector<18x18x8xf32> to vector<16x16x8xf32>
    %45 = vector.shape_cast %44 : vector<16x16x8xf32> to vector<256x8xf32>
    %46 = vector.extract_strided_slice %39 {offsets = [1, 0, 0], sizes = [16, 16, 8], strides = [1, 1, 1]} : vector<18x18x8xf32> to vector<16x16x8xf32>
    %47 = vector.shape_cast %46 : vector<16x16x8xf32> to vector<256x8xf32>
    %48 = vector.extract_strided_slice %39 {offsets = [1, 1, 0], sizes = [16, 16, 8], strides = [1, 1, 1]} : vector<18x18x8xf32> to vector<16x16x8xf32>
    %49 = vector.shape_cast %48 : vector<16x16x8xf32> to vector<256x8xf32>
    %50 = vector.extract_strided_slice %39 {offsets = [1, 2, 0], sizes = [16, 16, 8], strides = [1, 1, 1]} : vector<18x18x8xf32> to vector<16x16x8xf32>
    %51 = vector.shape_cast %50 : vector<16x16x8xf32> to vector<256x8xf32>
    %52 = vector.extract_strided_slice %39 {offsets = [2, 0, 0], sizes = [16, 16, 8], strides = [1, 1, 1]} : vector<18x18x8xf32> to vector<16x16x8xf32>
    %53 = vector.shape_cast %52 : vector<16x16x8xf32> to vector<256x8xf32>
    %54 = vector.extract_strided_slice %39 {offsets = [2, 1, 0], sizes = [16, 16, 8], strides = [1, 1, 1]} : vector<18x18x8xf32> to vector<16x16x8xf32>
    %55 = vector.shape_cast %54 : vector<16x16x8xf32> to vector<256x8xf32>
    %56 = vector.extract_strided_slice %39 {offsets = [2, 2, 0], sizes = [16, 16, 8], strides = [1, 1, 1]} : vector<18x18x8xf32> to vector<16x16x8xf32>
    %57 = vector.shape_cast %56 : vector<16x16x8xf32> to vector<256x8xf32>
    %58 = tpu.concatenate %41, %43, %45, %47, %49, %51, %53, %55, %57 in 1 : vector<256x8xf32>, vector<256x8xf32>, vector<256x8xf32>, vector<256x8xf32>, vector<256x8xf32>, vector<256x8xf32>, vector<256x8xf32>, vector<256x8xf32>, vector<256x8xf32> -> vector<256x72xf32>
    %59 = arith.truncf %58 : vector<256x72xf32> to vector<256x72xbf16>
    %c0_26 = arith.constant 0 : index
    %c0_27 = arith.constant 0 : index
    %60 = vector.load %arg4[%c0_26, %c0_27] : memref<72x128xbf16, #tpu.memory_space<vmem>>, vector<72x128xbf16>
    %cst_28 = arith.constant dense<0.000000e+00> : vector<256x128xf32>
    %61 = tpu.matmul %59, %60, %cst_28 {dimension_numbers = #tpu.dot_dimension_numbers<[1], [0], [0], [1], [0, 0, 1, 1], [], []>} : vector<256x72xbf16>, vector<72x128xbf16>, vector<256x128xf32> -> vector<256x128xf32>
    %c0_29 = arith.constant 0 : index
    %c0_30 = arith.constant 0 : index
    %62 = vector.load %arg5[%c0_29, %c0_30] : memref<1x128xf32, #tpu.memory_space<vmem>>, vector<1x128xf32>
    %63 = vector.shape_cast %62 : vector<1x128xf32> to vector<128xf32>
    %64 = vector.shape_cast %63 : vector<128xf32> to vector<1x128xf32>
    %65 = vector.broadcast %64 : vector<1x128xf32> to vector<256x128xf32>
    %66 = arith.addf %61, %65 : vector<256x128xf32>
    %c0_31 = arith.constant 0 : index
    %c0_32 = arith.constant 0 : index
    %c0_33 = arith.constant 0 : index
    %67 = vector.load %arg6[%c0_31, %c0_32, %c0_33] : memref<1x256x128xf32, #tpu.memory_space<vmem>>, vector<1x256x128xf32>
    %68 = vector.shape_cast %67 : vector<1x256x128xf32> to vector<256x128xf32>
    %69 = vector.shape_cast %66 : vector<256x128xf32> to vector<1x256x128xf32>
    tpu.vector_store %arg6[%c0_31, %c0_32, %c0_33], %69 {strides = array<i32>} : memref<1x256x128xf32, #tpu.memory_space<vmem>>, vector<1x256x128xf32>,
    return
  }
  func.func @transform_0(%arg0: i32) -> (i32, i32, i32, i32) {
    %c0_i32 = arith.constant 0 : i32
    %c0_i32_0 = arith.constant 0 : i32
    %c0_i32_1 = arith.constant 0 : i32
    %c0_i32_2 = arith.constant 0 : i32
    return %arg0, %c0_i32, %c0_i32_0, %c0_i32_1 : i32, i32, i32, i32
  }
  func.func @transform_1(%arg0: i32) -> (i32, i32) {
    %c0_i32 = arith.constant 0 : i32
    %c0_i32_0 = arith.constant 0 : i32
    %c0_i32_1 = arith.constant 0 : i32
    return %c0_i32, %c0_i32_0 : i32, i32
  }
  func.func @transform_2(%arg0: i32) -> (i32, i32) {
    %c0_i32 = arith.constant 0 : i32
    %c0_i32_0 = arith.constant 0 : i32
    %c0_i32_1 = arith.constant 0 : i32
    return %c0_i32, %c0_i32_0 : i32, i32
  }
  func.func @transform_3(%arg0: i32) -> (i32, i32) {
    %c0_i32 = arith.constant 0 : i32
    %c0_i32_0 = arith.constant 0 : i32
    %c0_i32_1 = arith.constant 0 : i32
    return %c0_i32, %c0_i32_0 : i32, i32
  }
  func.func @transform_4(%arg0: i32) -> (i32, i32) {
    %c0_i32 = arith.constant 0 : i32
    %c0_i32_0 = arith.constant 0 : i32
    %c0_i32_1 = arith.constant 0 : i32
    return %c0_i32, %c0_i32_0 : i32, i32
  }
  func.func @transform_5(%arg0: i32) -> (i32, i32, i32) {
    %c0_i32 = arith.constant 0 : i32
    %c0_i32_0 = arith.constant 0 : i32
    %c0_i32_1 = arith.constant 0 : i32
    return %arg0, %c0_i32, %c0_i32_0 : i32, i32, i32
  }
}

</mosaic_0001>

<llo_original>
// kernel: input_block_forward.1
$region0: #{input_block_forward.1}
  #allocation0 [shape = 'u32[]', space=smem, size = 0x4, offset = 0x4, fixed_abs, tag = 'smem constant byte address 0x4 - core index']
  #allocation1 [shape = 'u32[72,128]{1,0:T(1,128)}', space=vmem, size = 0x9000, scoped, tag = 'internal scratch']
  #allocation2 [shape = 'f32[18,18,8]{2,1,0:T(8,128)}', space=vmem, size = 0x36000, scoped, tag = 'scratch operand']
  %s0 = inlined_call_operand.vmem [shape: f32[2,18,18,4], index: 0, kind: input, shape index: {}]
  %s1 = inlined_call_operand.vmem [shape: bf16[36,8], index: 1, kind: input, shape index: {}]
  %s2 = inlined_call_operand.vmem [shape: f32[1,8], index: 2, kind: input, shape index: {}]
  %s3 = inlined_call_operand.vmem [shape: bf16[72,128], index: 3, kind: input, shape index: {}]
  %s4 = inlined_call_operand.vmem [shape: f32[1,128], index: 4, kind: input, shape index: {}]
  %s5 = inlined_call_operand.vmem [shape: f32[2,256,128], index: 5, kind: output, shape index: {}]
  %s6 = sld [smem:[#allocation0]]
  $region53: #{input_block_forward.1} parent=0
    _
  %s8 = ssub.s32 1, %s6
  %s9 = scalar_select 0, %s8, %s6
  loop: start=0, step=1, limit=4
  $region2: #{input_block_forward.1} parent=0 // loop_pre_header
    _
  $region3: #{input_block_forward.1} parent=0 // loop_header
    %s11 = sphi 0, %s15
    %p12 = scmp.ge.s32.totalorder %s11, 4
    %s21 = sphi 0, %s23
    %s24 = sphi 0, %s21
    %s25 = sphi 0, %s24
    %s41 = sphi 0, %s25
    %s45 = sphi 0, %s45
    %s47 = sphi 0, %s45
    %s48 = sphi 0, %s47
    %s62 = sphi 0, %s48
    %s66 = sphi 0, %s66
    %s68 = sphi 0, %s66
    %s69 = sphi 0, %s68
    %s83 = sphi 0, %s69
    %s87 = sphi 0, %s87
    %s89 = sphi 0, %s87
    %s90 = sphi 0, %s89
    %s104 = sphi 0, %s90
    %s108 = sphi 0, %s108
    %s110 = sphi 0, %s108
    %s111 = sphi 0, %s110
    %s125 = sphi 0, %s111
    %s131 = sphi 0, %s133
    %s134 = sphi 0, %s131
    %s135 = sphi 0, %s134
    %s151 = sphi 0, %s135
  $region4: #{input_block_forward.1} parent=0 // loop_header_branch
    %14 = sbr.rel (%p12) target = $region8
  $region5: #{input_block_forward.1} parent=0 // loop_body
    %s16 = ssub.s32 %s11, 1
    %s17 = ssub.s32 %s11, 2
    %s18 = sadd.s32 %s11, 1
    %s19 = ssub.s32 %s11, %s18
    %p20 = scmp.eq.s32.totalorder %s19, 0
    %s22 = sadd.s32 %s21, 1
    %s23 = scalar_select %p20, %s21, %s22
    %p26 = pneg %p20
    %p27 = scmp.eq.s32.totalorder %s11, 1
    %p28 = por %p26, %p27
    %p29 = scmp.ne.s32.totalorder %s21, %s24
    %p30 = scmp.eq.s32.totalorder %s11, 0
    %p31 = por %p29, %p30
    %p32 = scmp.ne.s32.totalorder %s21, %s24
    %p33 = scmp.eq.s32.totalorder %s16, 1
    %p34 = por %p32, %p33
    %p35 = scmp.ne.s32.totalorder %s24, %s25
    %p36 = scmp.eq.s32.totalorder %s16, 0
    %p37 = por %p35, %p36
    %p38 = scmp.ne.s32.totalorder %s24, %s25
    %p39 = scmp.eq.s32.totalorder %s17, 1
    %p40 = por %p38, %p39
    %p42 = scmp.ne.s32.totalorder %s25, %s41
    %p43 = scmp.eq.s32.totalorder %s17, 0
    %p44 = por %p42, %p43
    %s46 = sadd.s32 %s45, 1
    %p49 = scmp.eq.s32.totalorder %s11, 1
    %p50 = scmp.ne.s32.totalorder %s45, %s47
    %p51 = scmp.eq.s32.totalorder %s11, 0
    %p52 = por %p50, %p51
    %p53 = scmp.ne.s32.totalorder %s45, %s47
    %p54 = scmp.eq.s32.totalorder %s16, 1
    %p55 = por %p53, %p54
    %p56 = scmp.ne.s32.totalorder %s47, %s48
    %p57 = scmp.eq.s32.totalorder %s16, 0
    %p58 = por %p56, %p57
    %p59 = scmp.ne.s32.totalorder %s47, %s48
    %p60 = scmp.eq.s32.totalorder %s17, 1
    %p61 = por %p59, %p60
    %p63 = scmp.ne.s32.totalorder %s48, %s62
    %p64 = scmp.eq.s32.totalorder %s17, 0
    %p65 = por %p63, %p64
    %s67 = sadd.s32 %s66, 1
    %p70 = scmp.eq.s32.totalorder %s11, 1
    %p71 = scmp.ne.s32.totalorder %s66, %s68
    %p72 = scmp.eq.s32.totalorder %s11, 0
    %p73 = por %p71, %p72
    %p74 = scmp.ne.s32.totalorder %s66, %s68
    %p75 = scmp.eq.s32.totalorder %s16, 1
    %p76 = por %p74, %p75
    %p77 = scmp.ne.s32.totalorder %s68, %s69
    %p78 = scmp.eq.s32.totalorder %s16, 0
    %p79 = por %p77, %p78
    %p80 = scmp.ne.s32.totalorder %s68, %s69
    %p81 = scmp.eq.s32.totalorder %s17, 1
    %p82 = por %p80, %p81
    %p84 = scmp.ne.s32.totalorder %s69, %s83
    %p85 = scmp.eq.s32.totalorder %s17, 0
    %p86 = por %p84, %p85
    %s88 = sadd.s32 %s87, 1
    %p91 = scmp.eq.s32.totalorder %s11, 1
    %p92 = scmp.ne.s32.totalorder %s87, %s89
    %p93 = scmp.eq.s32.totalorder %s11, 0
    %p94 = por %p92, %p93
    %p95 = scmp.ne.s32.totalorder %s87, %s89
    %p96 = scmp.eq.s32.totalorder %s16, 1
    %p97 = por %p95, %p96
    %p98 = scmp.ne.s32.totalorder %s89, %s90
    %p99 = scmp.eq.s32.totalorder %s16, 0
    %p100 = por %p98, %p99
    %p101 = scmp.ne.s32.totalorder %s89, %s90
    %p102 = scmp.eq.s32.totalorder %s17, 1
    %p103 = por %p101, %p102
    %p105 = scmp.ne.s32.totalorder %s90, %s104
    %p106 = scmp.eq.s32.totalorder %s17, 0
    %p107 = por %p105, %p106
    %s109 = sadd.s32 %s108, 1
    %p112 = scmp.eq.s32.totalorder %s11, 1
    %p113 = scmp.ne.s32.totalorder %s108, %s110
    %p114 = scmp.eq.s32.totalorder %s11, 0
    %p115 = por %p113, %p114
    %p116 = scmp.ne.s32.totalorder %s108, %s110
    %p117 = scmp.eq.s32.totalorder %s16, 1
    %p118 = por %p116, %p117
    %p119 = scmp.ne.s32.totalorder %s110, %s111
    %p120 = scmp.eq.s32.totalorder %s16, 0
    %p121 = por %p119, %p120
    %p122 = scmp.ne.s32.totalorder %s110, %s111
    %p123 = scmp.eq.s32.totalorder %s17, 1
    %p124 = por %p122, %p123
    %p126 = scmp.ne.s32.totalorder %s111, %s125
    %p127 = scmp.eq.s32.totalorder %s17, 0
    %p128 = por %p126, %p127
    %s129 = ssub.s32 %s11, %s18
    %p130 = scmp.eq.s32.totalorder %s129, 0
    %s132 = sadd.s32 %s131, 1
    %s133 = scalar_select %p130, %s131, %s132
    %p136 = pneg %p130
    %p137 = scmp.eq.s32.totalorder %s11, 1
    %p138 = por %p136, %p137
    %p139 = scmp.ne.s32.totalorder %s131, %s134
    %p140 = scmp.eq.s32.totalorder %s11, 0
    %p141 = por %p139, %p140
    %p142 = scmp.ne.s32.totalorder %s131, %s134
    %p143 = scmp.eq.s32.totalorder %s16, 1
    %p144 = por %p142, %p143
    %p145 = scmp.ne.s32.totalorder %s134, %s135
    %p146 = scmp.eq.s32.totalorder %s16, 0
    %p147 = por %p145, %p146
    %p148 = scmp.ne.s32.totalorder %s134, %s135
    %p149 = scmp.eq.s32.totalorder %s17, 1
    %p150 = por %p148, %p149
    %p152 = scmp.ne.s32.totalorder %s135, %s151
    %p153 = scmp.eq.s32.totalorder %s17, 0
    %p154 = por %p152, %p153
    %p155 = scmp.le.s32.totalorder 1, %s11
    %p156 = scmp.lt.s32.totalorder %s11, 3
    %p157 = pnand %p155, %p156
    %p158 = pneg %p157
    // Predicated region
    $region9: #{input_block_forward.1} parent=5 // pred_check
      _
    $region10: #{input_block_forward.1} parent=5 // pred_check_branch
      %160 = sbr.rel (%p157) target = $region12
    $region11: #{input_block_forward.1} parent=5 // pred_region
      %s161 = ssub.s32 %s11, 1
      // Predicated region
      $region13: #{input_block_forward.1} parent=11 // pred_check
        %p162 = pneg %p58
      $region14: #{input_block_forward.1} parent=11 // pred_check_branch
        %164 = sbr.rel (%p162) target = $region16
      $region15: #{input_block_forward.1} parent=11 // pred_region
        _
      $region16: #{input_block_forward.1} parent=11 // pred_fallthru
        _
      // Predicated region
      $region17: #{input_block_forward.1} parent=11 // pred_check
        %p165 = pneg %p79
      $region18: #{input_block_forward.1} parent=11 // pred_check_branch
        %167 = sbr.rel (%p165) target = $region20
      $region19: #{input_block_forward.1} parent=11 // pred_region
        _
      $region20: #{input_block_forward.1} parent=11 // pred_fallthru
        _
      // Predicated region
      $region21: #{input_block_forward.1} parent=11 // pred_check
        %p168 = pneg %p100
      $region22: #{input_block_forward.1} parent=11 // pred_check_branch
        %170 = sbr.rel (%p168) target = $region24
      $region23: #{input_block_forward.1} parent=11 // pred_region
        _
      $region24: #{input_block_forward.1} parent=11 // pred_fallthru
        _
      // Predicated region
      $region25: #{input_block_forward.1} parent=11 // pred_check
        %p171 = pneg %p121
      $region26: #{input_block_forward.1} parent=11 // pred_check_branch
        %173 = sbr.rel (%p171) target = $region28
      $region27: #{input_block_forward.1} parent=11 // pred_region
        _
      $region28: #{input_block_forward.1} parent=11 // pred_fallthru
        _
    $region12: #{input_block_forward.1} parent=5 // pred_fallthru
      _
    %p174 = scmp.lt.s32.totalorder %s11, 2
    // Predicated region
    $region29: #{input_block_forward.1} parent=5 // pred_check
      %p175 = pneg %p174
    $region30: #{input_block_forward.1} parent=5 // pred_check_branch
      %177 = sbr.rel (%p175) target = $region32
    $region31: #{input_block_forward.1} parent=5 // pred_region
      // Predicated region
      $region33: #{input_block_forward.1} parent=31 // pred_check
        %p178 = pneg %p31
      $region34: #{input_block_forward.1} parent=31 // pred_check_branch
        %180 = sbr.rel (%p178) target = $region36
      $region35: #{input_block_forward.1} parent=31 // pred_region
        %p181 = scmp.lt.s32.totalorder %s11, 1
        %s182 = scalar_select %p181, %s11, 1
        %s183 = smul.addr %s182, 54
        %s184 = smul.addr %s183, 8
        %s185 = scalar_lea.vmem %s0, %s184
      $region36: #{input_block_forward.1} parent=31 // pred_fallthru
        _
    $region32: #{input_block_forward.1} parent=5 // pred_fallthru
      _
    %p186 = scmp.le.s32.totalorder 1, %s11
    %p187 = scmp.lt.s32.totalorder %s11, 3
    %p188 = pnand %p186, %p187
    %p189 = pneg %p188
    // Predicated region
    $region37: #{input_block_forward.1} parent=5 // pred_check
      _
    $region38: #{input_block_forward.1} parent=5 // pred_check_branch
      %191 = sbr.rel (%p188) target = $region40
    $region39: #{input_block_forward.1} parent=5 // pred_region
      %s192 = ssub.s32 %s11, 1
      %p193 = scmp.lt.s32.totalorder %s16, 1
      %s194 = scalar_select %p193, %s16, 1
      %s195 = smul.addr %s194, 54
      %s196 = smul.addr %s195, 8
      %s197 = scalar_lea.vmem %s0, %s196
      %p198 = pneg %p37
      %p199 = pneg %p34
      %p200 = pneg %p58
      %p201 = pneg %p55
      %p202 = pneg %p79
      %p203 = pneg %p76
      %p204 = pneg %p100
      %p205 = pneg %p97
      %p206 = pneg %p121
      %p207 = pneg %p118
      %p208 = pneg %p147
      %p209 = pneg %p144
      %p210 = scmp.lt.s32.totalorder %s16, 1
      %s211 = scalar_select %p210, %s16, 1
      %s212 = smul.addr %s211, 32
      %s213 = smul.addr %s212, 8
      %s214 = scalar_lea.vmem %s5, %s213
      %p215 = scmp.lt.s32.totalorder %s16, 1
      %s216 = scalar_select %p215, %s16, 1
      %s217 = smul.addr %s216, 54
      %s218 = smul.addr %s217, 8
      %s219 = scalar_lea.vmem %s0, %s218
      %p220 = scmp.lt.s32.totalorder %s16, 1
      %s221 = scalar_select %p220, %s16, 1
      %s222 = smul.addr %s221, 32
      %s223 = smul.addr %s222, 8
      %s224 = scalar_lea.vmem %s5, %s223
      %v226 = vld [vmem:[%s219] sm:$0xff]
      %v227 = vld [vmem:[%s219 + $0x8] sm:$0xff]
      %v228 = vld [vmem:[%s219 + $0x10] sm:$0x3]
      %v229 = vld [vmem:[%s219 + $0x18] sm:$0xff]
      %v230 = vld [vmem:[%s219 + $0x20] sm:$0xff]
      %v231 = vld [vmem:[%s219 + $0x28] sm:$0x3]
      %v232 = vld [vmem:[%s219 + $0x30] sm:$0xff]
      %v233 = vld [vmem:[%s219 + $0x38] sm:$0xff]
      %v234 = vld [vmem:[%s219 + $0x40] sm:$0x3]
      %v235 = vld [vmem:[%s219 + $0x48] sm:$0xff]
      %v236 = vld [vmem:[%s219 + $0x50] sm:$0xff]
      %v237 = vld [vmem:[%s219 + $0x58] sm:$0x3]
      %v238 = vld [vmem:[%s219 + $0x60] sm:$0xff]
      %v239 = vld [vmem:[%s219 + $0x68] sm:$0xff]
      %v240 = vld [vmem:[%s219 + $0x70] sm:$0x3]
      %v241 = vld [vmem:[%s219 + $0x78] sm:$0xff]
      %v242 = vld [vmem:[%s219 + $0x80] sm:$0xff]
      %v243 = vld [vmem:[%s219 + $0x88] sm:$0x3]
      %v244 = vld [vmem:[%s219 + $0x90] sm:$0xff]
      %v245 = vld [vmem:[%s219 + $0x98] sm:$0xff]
      %v246 = vld [vmem:[%s219 + $0xa0] sm:$0x3]
      %v247 = vld [vmem:[%s219 + $0xa8] sm:$0xff]
      %v248 = vld [vmem:[%s219 + $0xb0] sm:$0xff]
      %v249 = vld [vmem:[%s219 + $0xb8] sm:$0x3]
      %v250 = vld [vmem:[%s219 + $0xc0] sm:$0xff]
      %v251 = vld [vmem:[%s219 + $0xc8] sm:$0xff]
      %v252 = vld [vmem:[%s219 + $0xd0] sm:$0x3]
      %v253 = vld [vmem:[%s219 + $0xd8] sm:$0xff]
      %v254 = vld [vmem:[%s219 + $0xe0] sm:$0xff]
      %v255 = vld [vmem:[%s219 + $0xe8] sm:$0x3]
      %v256 = vld [vmem:[%s219 + $0xf0] sm:$0xff]
      %v257 = vld [vmem:[%s219 + $0xf8] sm:$0xff]
      %v258 = vld [vmem:[%s219 + $0x100] sm:$0x3]
      %v259 = vld [vmem:[%s219 + $0x108] sm:$0xff]
      %v260 = vld [vmem:[%s219 + $0x110] sm:$0xff]
      %v261 = vld [vmem:[%s219 + $0x118] sm:$0x3]
      %v262 = vld [vmem:[%s219 + $0x120] sm:$0xff]
      %v263 = vld [vmem:[%s219 + $0x128] sm:$0xff]
      %v264 = vld [vmem:[%s219 + $0x130] sm:$0x3]
      %v265 = vld [vmem:[%s219 + $0x138] sm:$0xff]
      %v266 = vld [vmem:[%s219 + $0x140] sm:$0xff]
      %v267 = vld [vmem:[%s219 + $0x148] sm:$0x3]
      %v268 = vld [vmem:[%s219 + $0x150] sm:$0xff]
      %v269 = vld [vmem:[%s219 + $0x158] sm:$0xff]
      %v270 = vld [vmem:[%s219 + $0x160] sm:$0x3]
      %v271 = vld [vmem:[%s219 + $0x168] sm:$0xff]
      %v272 = vld [vmem:[%s219 + $0x170] sm:$0xff]
      %v273 = vld [vmem:[%s219 + $0x178] sm:$0x3]
      %v274 = vld [vmem:[%s219 + $0x180] sm:$0xff]
      %v275 = vld [vmem:[%s219 + $0x188] sm:$0xff]
      %v276 = vld [vmem:[%s219 + $0x190] sm:$0x3]
      %v277 = vld [vmem:[%s219 + $0x198] sm:$0xff]
      %v278 = vld [vmem:[%s219 + $0x1a0] sm:$0xff]
      %v279 = vld [vmem:[%s219 + $0x1a8] sm:$0x3]
      %vm328 = vcmask 1046528
      %v329 = vrot.slane %v226, 1
      %v330 = vrot.slane %v227, 1
      %v331 = vsel %vm328, %v329, %v330
      %v332 = vrot.slane %v228, 1
      %v333 = vsel %vm328, %v330, %v332
      %v334 = vrot.slane %v229, 1
      %v335 = vrot.slane %v230, 1
      %v336 = vsel %vm328, %v334, %v335
      %v337 = vrot.slane %v231, 1
      %v338 = vsel %vm328, %v335, %v337
      %v339 = vrot.slane %v232, 1
      %v340 = vrot.slane %v233, 1
      %v341 = vsel %vm328, %v339, %v340
      %v342 = vrot.slane %v234, 1
      %v343 = vsel %vm328, %v340, %v342
      %v344 = vrot.slane %v235, 1
      %v345 = vrot.slane %v236, 1
      %v346 = vsel %vm328, %v344, %v345
      %v347 = vrot.slane %v237, 1
      %v348 = vsel %vm328, %v345, %v347
      %v349 = vrot.slane %v238, 1
      %v350 = vrot.slane %v239, 1
      %v351 = vsel %vm328, %v349, %v350
      %v352 = vrot.slane %v240, 1
      %v353 = vsel %vm328, %v350, %v352
      %v354 = vrot.slane %v241, 1
      %v355 = vrot.slane %v242, 1
      %v356 = vsel %vm328, %v354, %v355
      %v357 = vrot.slane %v243, 1
      %v358 = vsel %vm328, %v355, %v357
      %v359 = vrot.slane %v244, 1
      %v360 = vrot.slane %v245, 1
      %v361 = vsel %vm328, %v359, %v360
      %v362 = vrot.slane %v246, 1
      %v363 = vsel %vm328, %v360, %v362
      %v364 = vrot.slane %v247, 1
      %v365 = vrot.slane %v248, 1
      %v366 = vsel %vm328, %v364, %v365
      %v367 = vrot.slane %v249, 1
      %v368 = vsel %vm328, %v365, %v367
      %v369 = vrot.slane %v250, 1
      %v370 = vrot.slane %v251, 1
      %v371 = vsel %vm328, %v369, %v370
      %v372 = vrot.slane %v252, 1
      %v373 = vsel %vm328, %v370, %v372
      %v374 = vrot.slane %v253, 1
      %v375 = vrot.slane %v254, 1
      %v376 = vsel %vm328, %v374, %v375
      %v377 = vrot.slane %v255, 1
      %v378 = vsel %vm328, %v375, %v377
      %v379 = vrot.slane %v256, 1
      %v380 = vrot.slane %v257, 1
      %v381 = vsel %vm328, %v379, %v380
      %v382 = vrot.slane %v258, 1
      %v383 = vsel %vm328, %v380, %v382
      %v384 = vrot.slane %v259, 1
      %v385 = vrot.slane %v260, 1
      %v386 = vsel %vm328, %v384, %v385
      %v387 = vrot.slane %v261, 1
      %v388 = vsel %vm328, %v385, %v387
      %v389 = vrot.slane %v262, 1
      %v390 = vrot.slane %v263, 1
      %v391 = vsel %vm328, %v389, %v390
      %v392 = vrot.slane %v264, 1
      %v393 = vsel %vm328, %v390, %v392
      %v394 = vrot.slane %v265, 1
      %v395 = vrot.slane %v266, 1
      %v396 = vsel %vm328, %v394, %v395
      %v397 = vrot.slane %v267, 1
      %v398 = vsel %vm328, %v395, %v397
      %v399 = vrot.slane %v268, 1
      %v400 = vrot.slane %v269, 1
      %v401 = vsel %vm328, %v399, %v400
      %v402 = vrot.slane %v270, 1
      %v403 = vsel %vm328, %v400, %v402
      %v404 = vrot.slane %v271, 1
      %v405 = vrot.slane %v272, 1
      %v406 = vsel %vm328, %v404, %v405
      %v407 = vrot.slane %v273, 1
      %v408 = vsel %vm328, %v405, %v407
      %vm409 = vcmask 1045504
      %v410 = vrot.slane %v226, 2
      %v411 = vrot.slane %v227, 2
      %v412 = vsel %vm409, %v410, %v411
      %v413 = vrot.slane %v228, 2
      %v414 = vsel %vm409, %v411, %v413
      %v415 = vrot.slane %v229, 2
      %v416 = vrot.slane %v230, 2
      %v417 = vsel %vm409, %v415, %v416
      %v418 = vrot.slane %v231, 2
      %v419 = vsel %vm409, %v416, %v418
      %v420 = vrot.slane %v232, 2
      %v421 = vrot.slane %v233, 2
      %v422 = vsel %vm409, %v420, %v421
      %v423 = vrot.slane %v234, 2
      %v424 = vsel %vm409, %v421, %v423
      %v425 = vrot.slane %v235, 2
      %v426 = vrot.slane %v236, 2
      %v427 = vsel %vm409, %v425, %v426
      %v428 = vrot.slane %v237, 2
      %v429 = vsel %vm409, %v426, %v428
      %v430 = vrot.slane %v238, 2
      %v431 = vrot.slane %v239, 2
      %v432 = vsel %vm409, %v430, %v431
      %v433 = vrot.slane %v240, 2
      %v434 = vsel %vm409, %v431, %v433
      %v435 = vrot.slane %v241, 2
      %v436 = vrot.slane %v242, 2
      %v437 = vsel %vm409, %v435, %v436
      %v438 = vrot.slane %v243, 2
      %v439 = vsel %vm409, %v436, %v438
      %v440 = vrot.slane %v244, 2
      %v441 = vrot.slane %v245, 2
      %v442 = vsel %vm409, %v440, %v441
      %v443 = vrot.slane %v246, 2
      %v444 = vsel %vm409, %v441, %v443
      %v445 = vrot.slane %v247, 2
      %v446 = vrot.slane %v248, 2
      %v447 = vsel %vm409, %v445, %v446
      %v448 = vrot.slane %v249, 2
      %v449 = vsel %vm409, %v446, %v448
      %v450 = vrot.slane %v250, 2
      %v451 = vrot.slane %v251, 2
      %v452 = vsel %vm409, %v450, %v451
      %v453 = vrot.slane %v252, 2
      %v454 = vsel %vm409, %v451, %v453
      %v455 = vrot.slane %v253, 2
      %v456 = vrot.slane %v254, 2
      %v457 = vsel %vm409, %v455, %v456
      %v458 = vrot.slane %v255, 2
      %v459 = vsel %vm409, %v456, %v458
      %v460 = vrot.slane %v256, 2
      %v461 = vrot.slane %v257, 2
      %v462 = vsel %vm409, %v460, %v461
      %v463 = vrot.slane %v258, 2
      %v464 = vsel %vm409, %v461, %v463
      %v465 = vrot.slane %v259, 2
      %v466 = vrot.slane %v260, 2
      %v467 = vsel %vm409, %v465, %v466
      %v468 = vrot.slane %v261, 2
      %v469 = vsel %vm409, %v466, %v468
      %v470 = vrot.slane %v262, 2
      %v471 = vrot.slane %v263, 2
      %v472 = vsel %vm409, %v470, %v471
      %v473 = vrot.slane %v264, 2
      %v474 = vsel %vm409, %v471, %v473
      %v475 = vrot.slane %v265, 2
      %v476 = vrot.slane %v266, 2
      %v477 = vsel %vm409, %v475, %v476
      %v478 = vrot.slane %v267, 2
      %v479 = vsel %vm409, %v476, %v478
      %v480 = vrot.slane %v268, 2
      %v481 = vrot.slane %v269, 2
      %v482 = vsel %vm409, %v480, %v481
      %v483 = vrot.slane %v270, 2
      %v484 = vsel %vm409, %v481, %v483
      %v485 = vrot.slane %v271, 2
      %v486 = vrot.slane %v272, 2
      %v487 = vsel %vm409, %v485, %v486
      %v488 = vrot.slane %v273, 2
      %v489 = vsel %vm409, %v486, %v488
      %v493 = vrot.slane %v274, 1
      %v494 = vrot.slane %v275, 1
      %v495 = vsel %vm328, %v493, %v494
      %v496 = vrot.slane %v276, 1
      %v497 = vsel %vm328, %v494, %v496
      %v498 = vrot.slane %v274, 2
      %v499 = vrot.slane %v275, 2
      %v500 = vsel %vm409, %v498, %v499
      %v501 = vrot.slane %v276, 2
      %v502 = vsel %vm409, %v499, %v501
      %v506 = vrot.slane %v277, 1
      %v507 = vrot.slane %v278, 1
      %v508 = vsel %vm328, %v506, %v507
      %v509 = vrot.slane %v279, 1
      %v510 = vsel %vm328, %v507, %v509
      %v511 = vrot.slane %v277, 2
      %v512 = vrot.slane %v278, 2
      %v513 = vsel %vm409, %v511, %v512
      %v514 = vrot.slane %v279, 2
      %v515 = vsel %vm409, %v512, %v514
      %516 = vrot.lane.b32.xlu0 %v331, 4
      %v517 = vpop.permute.xlu0 %516
      %518 = vrot.lane.b32.xlu0 %v333, 4
      %v519 = vpop.permute.xlu0 %518
      %520 = vrot.lane.b32.xlu0 %v336, 4
      %v521 = vpop.permute.xlu0 %520
      %522 = vrot.lane.b32.xlu0 %v338, 4
      %v523 = vpop.permute.xlu0 %522
      %524 = vrot.lane.b32.xlu0 %v341, 4
      %v525 = vpop.permute.xlu0 %524
      %526 = vrot.lane.b32.xlu0 %v343, 4
      %v527 = vpop.permute.xlu0 %526
      %528 = vrot.lane.b32.xlu0 %v346, 4
      %v529 = vpop.permute.xlu0 %528
      %530 = vrot.lane.b32.xlu0 %v348, 4
      %v531 = vpop.permute.xlu0 %530
      %532 = vrot.lane.b32.xlu0 %v351, 4
      %v533 = vpop.permute.xlu0 %532
      %534 = vrot.lane.b32.xlu0 %v353, 4
      %v535 = vpop.permute.xlu0 %534
      %536 = vrot.lane.b32.xlu0 %v356, 4
      %v537 = vpop.permute.xlu0 %536
      %538 = vrot.lane.b32.xlu0 %v358, 4
      %v539 = vpop.permute.xlu0 %538
      %540 = vrot.lane.b32.xlu0 %v361, 4
      %v541 = vpop.permute.xlu0 %540
      %542 = vrot.lane.b32.xlu0 %v363, 4
      %v543 = vpop.permute.xlu0 %542
      %544 = vrot.lane.b32.xlu0 %v366, 4
      %v545 = vpop.permute.xlu0 %544
      %546 = vrot.lane.b32.xlu0 %v368, 4
      %v547 = vpop.permute.xlu0 %546
      %548 = vrot.lane.b32.xlu0 %v371, 4
      %v549 = vpop.permute.xlu0 %548
      %550 = vrot.lane.b32.xlu0 %v373, 4
      %v551 = vpop.permute.xlu0 %550
      %552 = vrot.lane.b32.xlu0 %v376, 4
      %v553 = vpop.permute.xlu0 %552
      %554 = vrot.lane.b32.xlu0 %v378, 4
      %v555 = vpop.permute.xlu0 %554
      %556 = vrot.lane.b32.xlu0 %v381, 4
      %v557 = vpop.permute.xlu0 %556
      %558 = vrot.lane.b32.xlu0 %v383, 4
      %v559 = vpop.permute.xlu0 %558
      %560 = vrot.lane.b32.xlu0 %v386, 4
      %v561 = vpop.permute.xlu0 %560
      %562 = vrot.lane.b32.xlu0 %v388, 4
      %v563 = vpop.permute.xlu0 %562
      %564 = vrot.lane.b32.xlu0 %v391, 4
      %v565 = vpop.permute.xlu0 %564
      %566 = vrot.lane.b32.xlu0 %v393, 4
      %v567 = vpop.permute.xlu0 %566
      %568 = vrot.lane.b32.xlu0 %v396, 4
      %v569 = vpop.permute.xlu0 %568
      %570 = vrot.lane.b32.xlu0 %v398, 4
      %v571 = vpop.permute.xlu0 %570
      %572 = vrot.lane.b32.xlu0 %v401, 4
      %v573 = vpop.permute.xlu0 %572
      %574 = vrot.lane.b32.xlu0 %v403, 4
      %v575 = vpop.permute.xlu0 %574
      %576 = vrot.lane.b32.xlu0 %v406, 4
      %v577 = vpop.permute.xlu0 %576
      %578 = vrot.lane.b32.xlu0 %v408, 4
      %v579 = vpop.permute.xlu0 %578
      %612 = vrot.lane.b32.xlu0 %v412, 8
      %v613 = vpop.permute.xlu0 %612
      %614 = vrot.lane.b32.xlu0 %v414, 8
      %v615 = vpop.permute.xlu0 %614
      %616 = vrot.lane.b32.xlu0 %v417, 8
      %v617 = vpop.permute.xlu0 %616
      %618 = vrot.lane.b32.xlu0 %v419, 8
      %v619 = vpop.permute.xlu0 %618
      %620 = vrot.lane.b32.xlu0 %v422, 8
      %v621 = vpop.permute.xlu0 %620
      %622 = vrot.lane.b32.xlu0 %v424, 8
      %v623 = vpop.permute.xlu0 %622
      %624 = vrot.lane.b32.xlu0 %v427, 8
      %v625 = vpop.permute.xlu0 %624
      %626 = vrot.lane.b32.xlu0 %v429, 8
      %v627 = vpop.permute.xlu0 %626
      %628 = vrot.lane.b32.xlu0 %v432, 8
      %v629 = vpop.permute.xlu0 %628
      %630 = vrot.lane.b32.xlu0 %v434, 8
      %v631 = vpop.permute.xlu0 %630
      %632 = vrot.lane.b32.xlu0 %v437, 8
      %v633 = vpop.permute.xlu0 %632
      %634 = vrot.lane.b32.xlu0 %v439, 8
      %v635 = vpop.permute.xlu0 %634
      %636 = vrot.lane.b32.xlu0 %v442, 8
      %v637 = vpop.permute.xlu0 %636
      %638 = vrot.lane.b32.xlu0 %v444, 8
      %v639 = vpop.permute.xlu0 %638
      %640 = vrot.lane.b32.xlu0 %v447, 8
      %v641 = vpop.permute.xlu0 %640
      %642 = vrot.lane.b32.xlu0 %v449, 8
      %v643 = vpop.permute.xlu0 %642
      %644 = vrot.lane.b32.xlu0 %v452, 8
      %v645 = vpop.permute.xlu0 %644
      %646 = vrot.lane.b32.xlu0 %v454, 8
      %v647 = vpop.permute.xlu0 %646
      %648 = vrot.lane.b32.xlu0 %v457, 8
      %v649 = vpop.permute.xlu0 %648
      %650 = vrot.lane.b32.xlu0 %v459, 8
      %v651 = vpop.permute.xlu0 %650
      %652 = vrot.lane.b32.xlu0 %v462, 8
      %v653 = vpop.permute.xlu0 %652
      %654 = vrot.lane.b32.xlu0 %v464, 8
      %v655 = vpop.permute.xlu0 %654
      %656 = vrot.lane.b32.xlu0 %v467, 8
      %v657 = vpop.permute.xlu0 %656
      %658 = vrot.lane.b32.xlu0 %v469, 8
      %v659 = vpop.permute.xlu0 %658
      %660 = vrot.lane.b32.xlu0 %v472, 8
      %v661 = vpop.permute.xlu0 %660
      %662 = vrot.lane.b32.xlu0 %v474, 8
      %v663 = vpop.permute.xlu0 %662
      %664 = vrot.lane.b32.xlu0 %v477, 8
      %v665 = vpop.permute.xlu0 %664
      %666 = vrot.lane.b32.xlu0 %v479, 8
      %v667 = vpop.permute.xlu0 %666
      %668 = vrot.lane.b32.xlu0 %v482, 8
      %v669 = vpop.permute.xlu0 %668
      %670 = vrot.lane.b32.xlu0 %v484, 8
      %v671 = vpop.permute.xlu0 %670
      %672 = vrot.lane.b32.xlu0 %v487, 8
      %v673 = vpop.permute.xlu0 %672
      %674 = vrot.lane.b32.xlu0 %v489, 8
      %v675 = vpop.permute.xlu0 %674
      %708 = vrot.lane.b32.xlu0 %v229, 12
      %v709 = vpop.permute.xlu0 %708
      %710 = vrot.lane.b32.xlu0 %v230, 12
      %v711 = vpop.permute.xlu0 %710
      %712 = vrot.lane.b32.xlu0 %v232, 12
      %v713 = vpop.permute.xlu0 %712
      %714 = vrot.lane.b32.xlu0 %v233, 12
      %v715 = vpop.permute.xlu0 %714
      %716 = vrot.lane.b32.xlu0 %v235, 12
      %v717 = vpop.permute.xlu0 %716
      %718 = vrot.lane.b32.xlu0 %v236, 12
      %v719 = vpop.permute.xlu0 %718
      %720 = vrot.lane.b32.xlu0 %v238, 12
      %v721 = vpop.permute.xlu0 %720
      %722 = vrot.lane.b32.xlu0 %v239, 12
      %v723 = vpop.permute.xlu0 %722
      %724 = vrot.lane.b32.xlu0 %v241, 12
      %v725 = vpop.permute.xlu0 %724
      %726 = vrot.lane.b32.xlu0 %v242, 12
      %v727 = vpop.permute.xlu0 %726
      %728 = vrot.lane.b32.xlu0 %v244, 12
      %v729 = vpop.permute.xlu0 %728
      %730 = vrot.lane.b32.xlu0 %v245, 12
      %v731 = vpop.permute.xlu0 %730
      %732 = vrot.lane.b32.xlu0 %v247, 12
      %v733 = vpop.permute.xlu0 %732
      %734 = vrot.lane.b32.xlu0 %v248, 12
      %v735 = vpop.permute.xlu0 %734
      %736 = vrot.lane.b32.xlu0 %v250, 12
      %v737 = vpop.permute.xlu0 %736
      %738 = vrot.lane.b32.xlu0 %v251, 12
      %v739 = vpop.permute.xlu0 %738
      %740 = vrot.lane.b32.xlu0 %v253, 12
      %v741 = vpop.permute.xlu0 %740
      %742 = vrot.lane.b32.xlu0 %v254, 12
      %v743 = vpop.permute.xlu0 %742
      %744 = vrot.lane.b32.xlu0 %v256, 12
      %v745 = vpop.permute.xlu0 %744
      %746 = vrot.lane.b32.xlu0 %v257, 12
      %v747 = vpop.permute.xlu0 %746
      %748 = vrot.lane.b32.xlu0 %v259, 12
      %v749 = vpop.permute.xlu0 %748
      %750 = vrot.lane.b32.xlu0 %v260, 12
      %v751 = vpop.permute.xlu0 %750
      %752 = vrot.lane.b32.xlu0 %v262, 12
      %v753 = vpop.permute.xlu0 %752
      %754 = vrot.lane.b32.xlu0 %v263, 12
      %v755 = vpop.permute.xlu0 %754
      %756 = vrot.lane.b32.xlu0 %v265, 12
      %v757 = vpop.permute.xlu0 %756
      %758 = vrot.lane.b32.xlu0 %v266, 12
      %v759 = vpop.permute.xlu0 %758
      %760 = vrot.lane.b32.xlu0 %v268, 12
      %v761 = vpop.permute.xlu0 %760
      %762 = vrot.lane.b32.xlu0 %v269, 12
      %v763 = vpop.permute.xlu0 %762
      %764 = vrot.lane.b32.xlu0 %v271, 12
      %v765 = vpop.permute.xlu0 %764
      %766 = vrot.lane.b32.xlu0 %v272, 12
      %v767 = vpop.permute.xlu0 %766
      %768 = vrot.lane.b32.xlu0 %v274, 12
      %v769 = vpop.permute.xlu0 %768
      %770 = vrot.lane.b32.xlu0 %v275, 12
      %v771 = vpop.permute.xlu0 %770
      %804 = vrot.lane.b32.xlu0 %v336, 16
      %v805 = vpop.permute.xlu0 %804
      %806 = vrot.lane.b32.xlu0 %v338, 16
      %v807 = vpop.permute.xlu0 %806
      %808 = vrot.lane.b32.xlu0 %v341, 16
      %v809 = vpop.permute.xlu0 %808
      %810 = vrot.lane.b32.xlu0 %v343, 16
      %v811 = vpop.permute.xlu0 %810
      %812 = vrot.lane.b32.xlu0 %v346, 16
      %v813 = vpop.permute.xlu0 %812
      %814 = vrot.lane.b32.xlu0 %v348, 16
      %v815 = vpop.permute.xlu0 %814
      %816 = vrot.lane.b32.xlu0 %v351, 16
      %v817 = vpop.permute.xlu0 %816
      %818 = vrot.lane.b32.xlu0 %v353, 16
      %v819 = vpop.permute.xlu0 %818
      %820 = vrot.lane.b32.xlu0 %v356, 16
      %v821 = vpop.permute.xlu0 %820
      %822 = vrot.lane.b32.xlu0 %v358, 16
      %v823 = vpop.permute.xlu0 %822
      %824 = vrot.lane.b32.xlu0 %v361, 16
      %v825 = vpop.permute.xlu0 %824
      %826 = vrot.lane.b32.xlu0 %v363, 16
      %v827 = vpop.permute.xlu0 %826
      %828 = vrot.lane.b32.xlu0 %v366, 16
      %v829 = vpop.permute.xlu0 %828
      %830 = vrot.lane.b32.xlu0 %v368, 16
      %v831 = vpop.permute.xlu0 %830
      %832 = vrot.lane.b32.xlu0 %v371, 16
      %v833 = vpop.permute.xlu0 %832
      %834 = vrot.lane.b32.xlu0 %v373, 16
      %v835 = vpop.permute.xlu0 %834
      %836 = vrot.lane.b32.xlu0 %v376, 16
      %v837 = vpop.permute.xlu0 %836
      %838 = vrot.lane.b32.xlu0 %v378, 16
      %v839 = vpop.permute.xlu0 %838
      %840 = vrot.lane.b32.xlu0 %v381, 16
      %v841 = vpop.permute.xlu0 %840
      %842 = vrot.lane.b32.xlu0 %v383, 16
      %v843 = vpop.permute.xlu0 %842
      %844 = vrot.lane.b32.xlu0 %v386, 16
      %v845 = vpop.permute.xlu0 %844
      %846 = vrot.lane.b32.xlu0 %v388, 16
      %v847 = vpop.permute.xlu0 %846
      %848 = vrot.lane.b32.xlu0 %v391, 16
      %v849 = vpop.permute.xlu0 %848
      %850 = vrot.lane.b32.xlu0 %v393, 16
      %v851 = vpop.permute.xlu0 %850
      %852 = vrot.lane.b32.xlu0 %v396, 16
      %v853 = vpop.permute.xlu0 %852
      %854 = vrot.lane.b32.xlu0 %v398, 16
      %v855 = vpop.permute.xlu0 %854
      %856 = vrot.lane.b32.xlu0 %v401, 16
      %v857 = vpop.permute.xlu0 %856
      %858 = vrot.lane.b32.xlu0 %v403, 16
      %v859 = vpop.permute.xlu0 %858
      %860 = vrot.lane.b32.xlu0 %v406, 16
      %v861 = vpop.permute.xlu0 %860
      %862 = vrot.lane.b32.xlu0 %v408, 16
      %v863 = vpop.permute.xlu0 %862
      %864 = vrot.lane.b32.xlu0 %v495, 16
      %v865 = vpop.permute.xlu0 %864
      %866 = vrot.lane.b32.xlu0 %v497, 16
      %v867 = vpop.permute.xlu0 %866
      %900 = vrot.lane.b32.xlu0 %v417, 20
      %v901 = vpop.permute.xlu0 %900
      %902 = vrot.lane.b32.xlu0 %v419, 20
      %v903 = vpop.permute.xlu0 %902
      %904 = vrot.lane.b32.xlu0 %v422, 20
      %v905 = vpop.permute.xlu0 %904
      %906 = vrot.lane.b32.xlu0 %v424, 20
      %v907 = vpop.permute.xlu0 %906
      %908 = vrot.lane.b32.xlu0 %v427, 20
      %v909 = vpop.permute.xlu0 %908
      %910 = vrot.lane.b32.xlu0 %v429, 20
      %v911 = vpop.permute.xlu0 %910
      %912 = vrot.lane.b32.xlu0 %v432, 20
      %v913 = vpop.permute.xlu0 %912
      %914 = vrot.lane.b32.xlu0 %v434, 20
      %v915 = vpop.permute.xlu0 %914
      %916 = vrot.lane.b32.xlu0 %v437, 20
      %v917 = vpop.permute.xlu0 %916
      %918 = vrot.lane.b32.xlu0 %v439, 20
      %v919 = vpop.permute.xlu0 %918
      %920 = vrot.lane.b32.xlu0 %v442, 20
      %v921 = vpop.permute.xlu0 %920
      %922 = vrot.lane.b32.xlu0 %v444, 20
      %v923 = vpop.permute.xlu0 %922
      %924 = vrot.lane.b32.xlu0 %v447, 20
      %v925 = vpop.permute.xlu0 %924
      %926 = vrot.lane.b32.xlu0 %v449, 20
      %v927 = vpop.permute.xlu0 %926
      %928 = vrot.lane.b32.xlu0 %v452, 20
      %v929 = vpop.permute.xlu0 %928
      %930 = vrot.lane.b32.xlu0 %v454, 20
      %v931 = vpop.permute.xlu0 %930
      %932 = vrot.lane.b32.xlu0 %v457, 20
      %v933 = vpop.permute.xlu0 %932
      %934 = vrot.lane.b32.xlu0 %v459, 20
      %v935 = vpop.permute.xlu0 %934
      %936 = vrot.lane.b32.xlu0 %v462, 20
      %v937 = vpop.permute.xlu0 %936
      %938 = vrot.lane.b32.xlu0 %v464, 20
      %v939 = vpop.permute.xlu0 %938
      %940 = vrot.lane.b32.xlu0 %v467, 20
      %v941 = vpop.permute.xlu0 %940
      %942 = vrot.lane.b32.xlu0 %v469, 20
      %v943 = vpop.permute.xlu0 %942
      %944 = vrot.lane.b32.xlu0 %v472, 20
      %v945 = vpop.permute.xlu0 %944
      %946 = vrot.lane.b32.xlu0 %v474, 20
      %v947 = vpop.permute.xlu0 %946
      %948 = vrot.lane.b32.xlu0 %v477, 20
      %v949 = vpop.permute.xlu0 %948
      %950 = vrot.lane.b32.xlu0 %v479, 20
      %v951 = vpop.permute.xlu0 %950
      %952 = vrot.lane.b32.xlu0 %v482, 20
      %v953 = vpop.permute.xlu0 %952
      %954 = vrot.lane.b32.xlu0 %v484, 20
      %v955 = vpop.permute.xlu0 %954
      %956 = vrot.lane.b32.xlu0 %v487, 20
      %v957 = vpop.permute.xlu0 %956
      %958 = vrot.lane.b32.xlu0 %v489, 20
      %v959 = vpop.permute.xlu0 %958
      %960 = vrot.lane.b32.xlu0 %v500, 20
      %v961 = vpop.permute.xlu0 %960
      %962 = vrot.lane.b32.xlu0 %v502, 20
      %v963 = vpop.permute.xlu0 %962
      %996 = vrot.lane.b32.xlu0 %v232, 24
      %v997 = vpop.permute.xlu0 %996
      %998 = vrot.lane.b32.xlu0 %v233, 24
      %v999 = vpop.permute.xlu0 %998
      %1000 = vrot.lane.b32.xlu0 %v235, 24
      %v1001 = vpop.permute.xlu0 %1000
      %1002 = vrot.lane.b32.xlu0 %v236, 24
      %v1003 = vpop.permute.xlu0 %1002
      %1004 = vrot.lane.b32.xlu0 %v238, 24
      %v1005 = vpop.permute.xlu0 %1004
      %1006 = vrot.lane.b32.xlu0 %v239, 24
      %v1007 = vpop.permute.xlu0 %1006
      %1008 = vrot.lane.b32.xlu0 %v241, 24
      %v1009 = vpop.permute.xlu0 %1008
      %1010 = vrot.lane.b32.xlu0 %v242, 24
      %v1011 = vpop.permute.xlu0 %1010
      %1012 = vrot.lane.b32.xlu0 %v244, 24
      %v1013 = vpop.permute.xlu0 %1012
      %1014 = vrot.lane.b32.xlu0 %v245, 24
      %v1015 = vpop.permute.xlu0 %1014
      %1016 = vrot.lane.b32.xlu0 %v247, 24
      %v1017 = vpop.permute.xlu0 %1016
      %1018 = vrot.lane.b32.xlu0 %v248, 24
      %v1019 = vpop.permute.xlu0 %1018
      %1020 = vrot.lane.b32.xlu0 %v250, 24
      %v1021 = vpop.permute.xlu0 %1020
      %1022 = vrot.lane.b32.xlu0 %v251, 24
      %v1023 = vpop.permute.xlu0 %1022
      %1024 = vrot.lane.b32.xlu0 %v253, 24
      %v1025 = vpop.permute.xlu0 %1024
      %1026 = vrot.lane.b32.xlu0 %v254, 24
      %v1027 = vpop.permute.xlu0 %1026
      %1028 = vrot.lane.b32.xlu0 %v256, 24
      %v1029 = vpop.permute.xlu0 %1028
      %1030 = vrot.lane.b32.xlu0 %v257, 24
      %v1031 = vpop.permute.xlu0 %1030
      %1032 = vrot.lane.b32.xlu0 %v259, 24
      %v1033 = vpop.permute.xlu0 %1032
      %1034 = vrot.lane.b32.xlu0 %v260, 24
      %v1035 = vpop.permute.xlu0 %1034
      %1036 = vrot.lane.b32.xlu0 %v262, 24
      %v1037 = vpop.permute.xlu0 %1036
      %1038 = vrot.lane.b32.xlu0 %v263, 24
      %v1039 = vpop.permute.xlu0 %1038
      %1040 = vrot.lane.b32.xlu0 %v265, 24
      %v1041 = vpop.permute.xlu0 %1040
      %1042 = vrot.lane.b32.xlu0 %v266, 24
      %v1043 = vpop.permute.xlu0 %1042
      %1044 = vrot.lane.b32.xlu0 %v268, 24
      %v1045 = vpop.permute.xlu0 %1044
      %1046 = vrot.lane.b32.xlu0 %v269, 24
      %v1047 = vpop.permute.xlu0 %1046
      %1048 = vrot.lane.b32.xlu0 %v271, 24
      %v1049 = vpop.permute.xlu0 %1048
      %1050 = vrot.lane.b32.xlu0 %v272, 24
      %v1051 = vpop.permute.xlu0 %1050
      %1052 = vrot.lane.b32.xlu0 %v274, 24
      %v1053 = vpop.permute.xlu0 %1052
      %1054 = vrot.lane.b32.xlu0 %v275, 24
      %v1055 = vpop.permute.xlu0 %1054
      %1056 = vrot.lane.b32.xlu0 %v277, 24
      %v1057 = vpop.permute.xlu0 %1056
      %1058 = vrot.lane.b32.xlu0 %v278, 24
      %v1059 = vpop.permute.xlu0 %1058
      %1092 = vrot.lane.b32.xlu0 %v341, 28
      %v1093 = vpop.permute.xlu0 %1092
      %1094 = vrot.lane.b32.xlu0 %v343, 28
      %v1095 = vpop.permute.xlu0 %1094
      %1096 = vrot.lane.b32.xlu0 %v346, 28
      %v1097 = vpop.permute.xlu0 %1096
      %1098 = vrot.lane.b32.xlu0 %v348, 28
      %v1099 = vpop.permute.xlu0 %1098
      %1100 = vrot.lane.b32.xlu0 %v351, 28
      %v1101 = vpop.permute.xlu0 %1100
      %1102 = vrot.lane.b32.xlu0 %v353, 28
      %v1103 = vpop.permute.xlu0 %1102
      %1104 = vrot.lane.b32.xlu0 %v356, 28
      %v1105 = vpop.permute.xlu0 %1104
      %1106 = vrot.lane.b32.xlu0 %v358, 28
      %v1107 = vpop.permute.xlu0 %1106
      %1108 = vrot.lane.b32.xlu0 %v361, 28
      %v1109 = vpop.permute.xlu0 %1108
      %1110 = vrot.lane.b32.xlu0 %v363, 28
      %v1111 = vpop.permute.xlu0 %1110
      %1112 = vrot.lane.b32.xlu0 %v366, 28
      %v1113 = vpop.permute.xlu0 %1112
      %1114 = vrot.lane.b32.xlu0 %v368, 28
      %v1115 = vpop.permute.xlu0 %1114
      %1116 = vrot.lane.b32.xlu0 %v371, 28
      %v1117 = vpop.permute.xlu0 %1116
      %1118 = vrot.lane.b32.xlu0 %v373, 28
      %v1119 = vpop.permute.xlu0 %1118
      %1120 = vrot.lane.b32.xlu0 %v376, 28
      %v1121 = vpop.permute.xlu0 %1120
      %1122 = vrot.lane.b32.xlu0 %v378, 28
      %v1123 = vpop.permute.xlu0 %1122
      %1124 = vrot.lane.b32.xlu0 %v381, 28
      %v1125 = vpop.permute.xlu0 %1124
      %1126 = vrot.lane.b32.xlu0 %v383, 28
      %v1127 = vpop.permute.xlu0 %1126
      %1128 = vrot.lane.b32.xlu0 %v386, 28
      %v1129 = vpop.permute.xlu0 %1128
      %1130 = vrot.lane.b32.xlu0 %v388, 28
      %v1131 = vpop.permute.xlu0 %1130
      %1132 = vrot.lane.b32.xlu0 %v391, 28
      %v1133 = vpop.permute.xlu0 %1132
      %1134 = vrot.lane.b32.xlu0 %v393, 28
      %v1135 = vpop.permute.xlu0 %1134
      %1136 = vrot.lane.b32.xlu0 %v396, 28
      %v1137 = vpop.permute.xlu0 %1136
      %1138 = vrot.lane.b32.xlu0 %v398, 28
      %v1139 = vpop.permute.xlu0 %1138
      %1140 = vrot.lane.b32.xlu0 %v401, 28
      %v1141 = vpop.permute.xlu0 %1140
      %1142 = vrot.lane.b32.xlu0 %v403, 28
      %v1143 = vpop.permute.xlu0 %1142
      %1144 = vrot.lane.b32.xlu0 %v406, 28
      %v1145 = vpop.permute.xlu0 %1144
      %1146 = vrot.lane.b32.xlu0 %v408, 28
      %v1147 = vpop.permute.xlu0 %1146
      %1148 = vrot.lane.b32.xlu0 %v495, 28
      %v1149 = vpop.permute.xlu0 %1148
      %1150 = vrot.lane.b32.xlu0 %v497, 28
      %v1151 = vpop.permute.xlu0 %1150
      %1152 = vrot.lane.b32.xlu0 %v508, 28
      %v1153 = vpop.permute.xlu0 %1152
      %1154 = vrot.lane.b32.xlu0 %v510, 28
      %v1155 = vpop.permute.xlu0 %1154
      %1188 = vrot.lane.b32.xlu0 %v422, 32
      %v1189 = vpop.permute.xlu0 %1188
      %1190 = vrot.lane.b32.xlu0 %v424, 32
      %v1191 = vpop.permute.xlu0 %1190
      %1192 = vrot.lane.b32.xlu0 %v427, 32
      %v1193 = vpop.permute.xlu0 %1192
      %1194 = vrot.lane.b32.xlu0 %v429, 32
      %v1195 = vpop.permute.xlu0 %1194
      %1196 = vrot.lane.b32.xlu0 %v432, 32
      %v1197 = vpop.permute.xlu0 %1196
      %1198 = vrot.lane.b32.xlu0 %v434, 32
      %v1199 = vpop.permute.xlu0 %1198
      %1200 = vrot.lane.b32.xlu0 %v437, 32
      %v1201 = vpop.permute.xlu0 %1200
      %1202 = vrot.lane.b32.xlu0 %v439, 32
      %v1203 = vpop.permute.xlu0 %1202
      %1204 = vrot.lane.b32.xlu0 %v442, 32
      %v1205 = vpop.permute.xlu0 %1204
      %1206 = vrot.lane.b32.xlu0 %v444, 32
      %v1207 = vpop.permute.xlu0 %1206
      %1208 = vrot.lane.b32.xlu0 %v447, 32
      %v1209 = vpop.permute.xlu0 %1208
      %1210 = vrot.lane.b32.xlu0 %v449, 32
      %v1211 = vpop.permute.xlu0 %1210
      %1212 = vrot.lane.b32.xlu0 %v452, 32
      %v1213 = vpop.permute.xlu0 %1212
      %1214 = vrot.lane.b32.xlu0 %v454, 32
      %v1215 = vpop.permute.xlu0 %1214
      %1216 = vrot.lane.b32.xlu0 %v457, 32
      %v1217 = vpop.permute.xlu0 %1216
      %1218 = vrot.lane.b32.xlu0 %v459, 32
      %v1219 = vpop.permute.xlu0 %1218
      %1220 = vrot.lane.b32.xlu0 %v462, 32
      %v1221 = vpop.permute.xlu0 %1220
      %1222 = vrot.lane.b32.xlu0 %v464, 32
      %v1223 = vpop.permute.xlu0 %1222
      %1224 = vrot.lane.b32.xlu0 %v467, 32
      %v1225 = vpop.permute.xlu0 %1224
      %1226 = vrot.lane.b32.xlu0 %v469, 32
      %v1227 = vpop.permute.xlu0 %1226
      %1228 = vrot.lane.b32.xlu0 %v472, 32
      %v1229 = vpop.permute.xlu0 %1228
      %1230 = vrot.lane.b32.xlu0 %v474, 32
      %v1231 = vpop.permute.xlu0 %1230
      %1232 = vrot.lane.b32.xlu0 %v477, 32
      %v1233 = vpop.permute.xlu0 %1232
      %1234 = vrot.lane.b32.xlu0 %v479, 32
      %v1235 = vpop.permute.xlu0 %1234
      %1236 = vrot.lane.b32.xlu0 %v482, 32
      %v1237 = vpop.permute.xlu0 %1236
      %1238 = vrot.lane.b32.xlu0 %v484, 32
      %v1239 = vpop.permute.xlu0 %1238
      %1240 = vrot.lane.b32.xlu0 %v487, 32
      %v1241 = vpop.permute.xlu0 %1240
      %1242 = vrot.lane.b32.xlu0 %v489, 32
      %v1243 = vpop.permute.xlu0 %1242
      %1244 = vrot.lane.b32.xlu0 %v500, 32
      %v1245 = vpop.permute.xlu0 %1244
      %1246 = vrot.lane.b32.xlu0 %v502, 32
      %v1247 = vpop.permute.xlu0 %1246
      %1248 = vrot.lane.b32.xlu0 %v513, 32
      %v1249 = vpop.permute.xlu0 %1248
      %1250 = vrot.lane.b32.xlu0 %v515, 32
      %v1251 = vpop.permute.xlu0 %1250
      %vm1284 = vcmask 31744
      %v1285 = vsel %vm1284, %v226, %v517
      %v1286 = vsel %vm1284, %v227, %v519
      %v1287 = vsel %vm1284, %v229, %v521
      %v1288 = vsel %vm1284, %v230, %v523
      %v1289 = vsel %vm1284, %v232, %v525
      %v1290 = vsel %vm1284, %v233, %v527
      %v1291 = vsel %vm1284, %v235, %v529
      %v1292 = vsel %vm1284, %v236, %v531
      %v1293 = vsel %vm1284, %v238, %v533
      %v1294 = vsel %vm1284, %v239, %v535
      %v1295 = vsel %vm1284, %v241, %v537
      %v1296 = vsel %vm1284, %v242, %v539
      %v1297 = vsel %vm1284, %v244, %v541
      %v1298 = vsel %vm1284, %v245, %v543
      %v1299 = vsel %vm1284, %v247, %v545
      %v1300 = vsel %vm1284, %v248, %v547
      %v1301 = vsel %vm1284, %v250, %v549
      %v1302 = vsel %vm1284, %v251, %v551
      %v1303 = vsel %vm1284, %v253, %v553
      %v1304 = vsel %vm1284, %v254, %v555
      %v1305 = vsel %vm1284, %v256, %v557
      %v1306 = vsel %vm1284, %v257, %v559
      %v1307 = vsel %vm1284, %v259, %v561
      %v1308 = vsel %vm1284, %v260, %v563
      %v1309 = vsel %vm1284, %v262, %v565
      %v1310 = vsel %vm1284, %v263, %v567
      %v1311 = vsel %vm1284, %v265, %v569
      %v1312 = vsel %vm1284, %v266, %v571
      %v1313 = vsel %vm1284, %v268, %v573
      %v1314 = vsel %vm1284, %v269, %v575
      %v1315 = vsel %vm1284, %v271, %v577
      %v1316 = vsel %vm1284, %v272, %v579
      %vm1317 = vcmask 64512
      %v1318 = vsel %vm1317, %v1285, %v613
      %v1319 = vsel %vm1317, %v1286, %v615
      %v1320 = vsel %vm1317, %v1287, %v617
      %v1321 = vsel %vm1317, %v1288, %v619
      %v1322 = vsel %vm1317, %v1289, %v621
      %v1323 = vsel %vm1317, %v1290, %v623
      %v1324 = vsel %vm1317, %v1291, %v625
      %v1325 = vsel %vm1317, %v1292, %v627
      %v1326 = vsel %vm1317, %v1293, %v629
      %v1327 = vsel %vm1317, %v1294, %v631
      %v1328 = vsel %vm1317, %v1295, %v633
      %v1329 = vsel %vm1317, %v1296, %v635
      %v1330 = vsel %vm1317, %v1297, %v637
      %v1331 = vsel %vm1317, %v1298, %v639
      %v1332 = vsel %vm1317, %v1299, %v641
      %v1333 = vsel %vm1317, %v1300, %v643
      %v1334 = vsel %vm1317, %v1301, %v645
      %v1335 = vsel %vm1317, %v1302, %v647
      %v1336 = vsel %vm1317, %v1303, %v649
      %v1337 = vsel %vm1317, %v1304, %v651
      %v1338 = vsel %vm1317, %v1305, %v653
      %v1339 = vsel %vm1317, %v1306, %v655
      %v1340 = vsel %vm1317, %v1307, %v657
      %v1341 = vsel %vm1317, %v1308, %v659
      %v1342 = vsel %vm1317, %v1309, %v661
      %v1343 = vsel %vm1317, %v1310, %v663
      %v1344 = vsel %vm1317, %v1311, %v665
      %v1345 = vsel %vm1317, %v1312, %v667
      %v1346 = vsel %vm1317, %v1313, %v669
      %v1347 = vsel %vm1317, %v1314, %v671
      %v1348 = vsel %vm1317, %v1315, %v673
      %v1349 = vsel %vm1317, %v1316, %v675
      %vm1350 = vcmask 97280
      %v1351 = vsel %vm1350, %v1318, %v709
      %v1352 = vsel %vm1350, %v1319, %v711
      %v1353 = vsel %vm1350, %v1320, %v713
      %v1354 = vsel %vm1350, %v1321, %v715
      %v1355 = vsel %vm1350, %v1322, %v717
      %v1356 = vsel %vm1350, %v1323, %v719
      %v1357 = vsel %vm1350, %v1324, %v721
      %v1358 = vsel %vm1350, %v1325, %v723
      %v1359 = vsel %vm1350, %v1326, %v725
      %v1360 = vsel %vm1350, %v1327, %v727
      %v1361 = vsel %vm1350, %v1328, %v729
      %v1362 = vsel %vm1350, %v1329, %v731
      %v1363 = vsel %vm1350, %v1330, %v733
      %v1364 = vsel %vm1350, %v1331, %v735
      %v1365 = vsel %vm1350, %v1332, %v737
      %v1366 = vsel %vm1350, %v1333, %v739
      %v1367 = vsel %vm1350, %v1334, %v741
      %v1368 = vsel %vm1350, %v1335, %v743
      %v1369 = vsel %vm1350, %v1336, %v745
      %v1370 = vsel %vm1350, %v1337, %v747
      %v1371 = vsel %vm1350, %v1338, %v749
      %v1372 = vsel %vm1350, %v1339, %v751
      %v1373 = vsel %vm1350, %v1340, %v753
      %v1374 = vsel %vm1350, %v1341, %v755
      %v1375 = vsel %vm1350, %v1342, %v757
      %v1376 = vsel %vm1350, %v1343, %v759
      %v1377 = vsel %vm1350, %v1344, %v761
      %v1378 = vsel %vm1350, %v1345, %v763
      %v1379 = vsel %vm1350, %v1346, %v765
      %v1380 = vsel %vm1350, %v1347, %v767
      %v1381 = vsel %vm1350, %v1348, %v769
      %v1382 = vsel %vm1350, %v1349, %v771
      %vm1383 = vcmask 130048
      %v1384 = vsel %vm1383, %v1351, %v805
      %v1385 = vsel %vm1383, %v1352, %v807
      %v1386 = vsel %vm1383, %v1353, %v809
      %v1387 = vsel %vm1383, %v1354, %v811
      %v1388 = vsel %vm1383, %v1355, %v813
      %v1389 = vsel %vm1383, %v1356, %v815
      %v1390 = vsel %vm1383, %v1357, %v817
      %v1391 = vsel %vm1383, %v1358, %v819
      %v1392 = vsel %vm1383, %v1359, %v821
      %v1393 = vsel %vm1383, %v1360, %v823
      %v1394 = vsel %vm1383, %v1361, %v825
      %v1395 = vsel %vm1383, %v1362, %v827
      %v1396 = vsel %vm1383, %v1363, %v829
      %v1397 = vsel %vm1383, %v1364, %v831
      %v1398 = vsel %vm1383, %v1365, %v833
      %v1399 = vsel %vm1383, %v1366, %v835
      %v1400 = vsel %vm1383, %v1367, %v837
      %v1401 = vsel %vm1383, %v1368, %v839
      %v1402 = vsel %vm1383, %v1369, %v841
      %v1403 = vsel %vm1383, %v1370, %v843
      %v1404 = vsel %vm1383, %v1371, %v845
      %v1405 = vsel %vm1383, %v1372, %v847
      %v1406 = vsel %vm1383, %v1373, %v849
      %v1407 = vsel %vm1383, %v1374, %v851
      %v1408 = vsel %vm1383, %v1375, %v853
      %v1409 = vsel %vm1383, %v1376, %v855
      %v1410 = vsel %vm1383, %v1377, %v857
      %v1411 = vsel %vm1383, %v1378, %v859
      %v1412 = vsel %vm1383, %v1379, %v861
      %v1413 = vsel %vm1383, %v1380, %v863
      %v1414 = vsel %vm1383, %v1381, %v865
      %v1415 = vsel %vm1383, %v1382, %v867
      %vm1416 = vcmask 162816
      %v1417 = vsel %vm1416, %v1384, %v901
      %v1418 = vsel %vm1416, %v1385, %v903
      %v1419 = vsel %vm1416, %v1386, %v905
      %v1420 = vsel %vm1416, %v1387, %v907
      %v1421 = vsel %vm1416, %v1388, %v909
      %v1422 = vsel %vm1416, %v1389, %v911
      %v1423 = vsel %vm1416, %v1390, %v913
      %v1424 = vsel %vm1416, %v1391, %v915
      %v1425 = vsel %vm1416, %v1392, %v917
      %v1426 = vsel %vm1416, %v1393, %v919
      %v1427 = vsel %vm1416, %v1394, %v921
      %v1428 = vsel %vm1416, %v1395, %v923
      %v1429 = vsel %vm1416, %v1396, %v925
      %v1430 = vsel %vm1416, %v1397, %v927
      %v1431 = vsel %vm1416, %v1398, %v929
      %v1432 = vsel %vm1416, %v1399, %v931
      %v1433 = vsel %vm1416, %v1400, %v933
      %v1434 = vsel %vm1416, %v1401, %v935
      %v1435 = vsel %vm1416, %v1402, %v937
      %v1436 = vsel %vm1416, %v1403, %v939
      %v1437 = vsel %vm1416, %v1404, %v941
      %v1438 = vsel %vm1416, %v1405, %v943
      %v1439 = vsel %vm1416, %v1406, %v945
      %v1440 = vsel %vm1416, %v1407, %v947
      %v1441 = vsel %vm1416, %v1408, %v949
      %v1442 = vsel %vm1416, %v1409, %v951
      %v1443 = vsel %vm1416, %v1410, %v953
      %v1444 = vsel %vm1416, %v1411, %v955
      %v1445 = vsel %vm1416, %v1412, %v957
      %v1446 = vsel %vm1416, %v1413, %v959
      %v1447 = vsel %vm1416, %v1414, %v961
      %v1448 = vsel %vm1416, %v1415, %v963
      %vm1449 = vcmask 195584
      %v1450 = vsel %vm1449, %v1417, %v997
      %v1451 = vsel %vm1449, %v1418, %v999
      %v1452 = vsel %vm1449, %v1419, %v1001
      %v1453 = vsel %vm1449, %v1420, %v1003
      %v1454 = vsel %vm1449, %v1421, %v1005
      %v1455 = vsel %vm1449, %v1422, %v1007
      %v1456 = vsel %vm1449, %v1423, %v1009
      %v1457 = vsel %vm1449, %v1424, %v1011
      %v1458 = vsel %vm1449, %v1425, %v1013
      %v1459 = vsel %vm1449, %v1426, %v1015
      %v1460 = vsel %vm1449, %v1427, %v1017
      %v1461 = vsel %vm1449, %v1428, %v1019
      %v1462 = vsel %vm1449, %v1429, %v1021
      %v1463 = vsel %vm1449, %v1430, %v1023
      %v1464 = vsel %vm1449, %v1431, %v1025
      %v1465 = vsel %vm1449, %v1432, %v1027
      %v1466 = vsel %vm1449, %v1433, %v1029
      %v1467 = vsel %vm1449, %v1434, %v1031
      %v1468 = vsel %vm1449, %v1435, %v1033
      %v1469 = vsel %vm1449, %v1436, %v1035
      %v1470 = vsel %vm1449, %v1437, %v1037
      %v1471 = vsel %vm1449, %v1438, %v1039
      %v1472 = vsel %vm1449, %v1439, %v1041
      %v1473 = vsel %vm1449, %v1440, %v1043
      %v1474 = vsel %vm1449, %v1441, %v1045
      %v1475 = vsel %vm1449, %v1442, %v1047
      %v1476 = vsel %vm1449, %v1443, %v1049
      %v1477 = vsel %vm1449, %v1444, %v1051
      %v1478 = vsel %vm1449, %v1445, %v1053
      %v1479 = vsel %vm1449, %v1446, %v1055
      %v1480 = vsel %vm1449, %v1447, %v1057
      %v1481 = vsel %vm1449, %v1448, %v1059
      %vm1482 = vcmask 228352
      %v1483 = vsel %vm1482, %v1450, %v1093
      %v1484 = vsel %vm1482, %v1451, %v1095
      %v1485 = vsel %vm1482, %v1452, %v1097
      %v1486 = vsel %vm1482, %v1453, %v1099
      %v1487 = vsel %vm1482, %v1454, %v1101
      %v1488 = vsel %vm1482, %v1455, %v1103
      %v1489 = vsel %vm1482, %v1456, %v1105
      %v1490 = vsel %vm1482, %v1457, %v1107
      %v1491 = vsel %vm1482, %v1458, %v1109
      %v1492 = vsel %vm1482, %v1459, %v1111
      %v1493 = vsel %vm1482, %v1460, %v1113
      %v1494 = vsel %vm1482, %v1461, %v1115
      %v1495 = vsel %vm1482, %v1462, %v1117
      %v1496 = vsel %vm1482, %v1463, %v1119
      %v1497 = vsel %vm1482, %v1464, %v1121
      %v1498 = vsel %vm1482, %v1465, %v1123
      %v1499 = vsel %vm1482, %v1466, %v1125
      %v1500 = vsel %vm1482, %v1467, %v1127
      %v1501 = vsel %vm1482, %v1468, %v1129
      %v1502 = vsel %vm1482, %v1469, %v1131
      %v1503 = vsel %vm1482, %v1470, %v1133
      %v1504 = vsel %vm1482, %v1471, %v1135
      %v1505 = vsel %vm1482, %v1472, %v1137
      %v1506 = vsel %vm1482, %v1473, %v1139
      %v1507 = vsel %vm1482, %v1474, %v1141
      %v1508 = vsel %vm1482, %v1475, %v1143
      %v1509 = vsel %vm1482, %v1476, %v1145
      %v1510 = vsel %vm1482, %v1477, %v1147
      %v1511 = vsel %vm1482, %v1478, %v1149
      %v1512 = vsel %vm1482, %v1479, %v1151
      %v1513 = vsel %vm1482, %v1480, %v1153
      %v1514 = vsel %vm1482, %v1481, %v1155
      %vm1515 = vcmask 261120
      %v1516 = vsel %vm1515, %v1483, %v1189
      %v1517 = vsel %vm1515, %v1484, %v1191
      %v1518 = vsel %vm1515, %v1485, %v1193
      %v1519 = vsel %vm1515, %v1486, %v1195
      %v1520 = vsel %vm1515, %v1487, %v1197
      %v1521 = vsel %vm1515, %v1488, %v1199
      %v1522 = vsel %vm1515, %v1489, %v1201
      %v1523 = vsel %vm1515, %v1490, %v1203
      %v1524 = vsel %vm1515, %v1491, %v1205
      %v1525 = vsel %vm1515, %v1492, %v1207
      %v1526 = vsel %vm1515, %v1493, %v1209
      %v1527 = vsel %vm1515, %v1494, %v1211
      %v1528 = vsel %vm1515, %v1495, %v1213
      %v1529 = vsel %vm1515, %v1496, %v1215
      %v1530 = vsel %vm1515, %v1497, %v1217
      %v1531 = vsel %vm1515, %v1498, %v1219
      %v1532 = vsel %vm1515, %v1499, %v1221
      %v1533 = vsel %vm1515, %v1500, %v1223
      %v1534 = vsel %vm1515, %v1501, %v1225
      %v1535 = vsel %vm1515, %v1502, %v1227
      %v1536 = vsel %vm1515, %v1503, %v1229
      %v1537 = vsel %vm1515, %v1504, %v1231
      %v1538 = vsel %vm1515, %v1505, %v1233
      %v1539 = vsel %vm1515, %v1506, %v1235
      %v1540 = vsel %vm1515, %v1507, %v1237
      %v1541 = vsel %vm1515, %v1508, %v1239
      %v1542 = vsel %vm1515, %v1509, %v1241
      %v1543 = vsel %vm1515, %v1510, %v1243
      %v1544 = vsel %vm1515, %v1511, %v1245
      %v1545 = vsel %vm1515, %v1512, %v1247
      %v1546 = vsel %vm1515, %v1513, %v1249
      %v1547 = vsel %vm1515, %v1514, %v1251
      %v1548 = vpack.c.bf16 %v1517, %v1516
      %v1549 = vpack.c.bf16 %v1519, %v1518
      %v1550 = vpack.c.bf16 %v1521, %v1520
      %v1551 = vpack.c.bf16 %v1523, %v1522
      %v1552 = vpack.c.bf16 %v1525, %v1524
      %v1553 = vpack.c.bf16 %v1527, %v1526
      %v1554 = vpack.c.bf16 %v1529, %v1528
      %v1555 = vpack.c.bf16 %v1531, %v1530
      %v1556 = vpack.c.bf16 %v1533, %v1532
      %v1557 = vpack.c.bf16 %v1535, %v1534
      %v1558 = vpack.c.bf16 %v1537, %v1536
      %v1559 = vpack.c.bf16 %v1539, %v1538
      %v1560 = vpack.c.bf16 %v1541, %v1540
      %v1561 = vpack.c.bf16 %v1543, %v1542
      %v1562 = vpack.c.bf16 %v1545, %v1544
      %v1563 = vpack.c.bf16 %v1547, %v1546
      %v1564 = vld [vmem:[%s1] sm:$0xf]
      %v1565 = vld [vmem:[%s1 + $0x4] sm:$0xf]
      %v1566 = vld [vmem:[%s1 + $0x8] sm:$0xf]
      %v1567 = vld [vmem:[%s1 + $0xc] sm:$0xf]
      %v1568 = vld [vmem:[%s1 + $0x10] sm:$0x3]
      %v1569 = vld [vmem:[%s2] sm:$0x1]
      %v1571 = vperm.slane %v1569, 0
      %v1578 = vunpack.c.l.b16 %v1564
      %v1579 = vunpack.c.l.b16 %v1565
      %v1580 = vunpack.c.l.b16 %v1566
      %v1581 = vunpack.c.l.b16 %v1567
      %v1582 = vunpack.c.l.b16 %v1568
      %v1583 = vpack.c.b16 %v1579, %v1578
      %v1584 = vpack.c.b16 %v1581, %v1580
      %v1585 = vpack.c.b16 %v1582, %v1582
      %vm1588 = vcmask 293888
      %v1590 = vsel %vm1588, %v1548, 0
      %v1593 = vsel %vm1588, %v1549, 0
      %v1596 = vsel %vm1588, %v1550, 0
      %v1599 = vsel %vm1588, %v1551, 0
      %v1602 = vsel %vm1588, %v1552, 0
      %v1605 = vsel %vm1588, %v1553, 0
      %v1608 = vsel %vm1588, %v1554, 0
      %v1611 = vsel %vm1588, %v1555, 0
      %v1614 = vsel %vm1588, %v1556, 0
      %v1617 = vsel %vm1588, %v1557, 0
      %v1620 = vsel %vm1588, %v1558, 0
      %v1623 = vsel %vm1588, %v1559, 0
      %v1626 = vsel %vm1588, %v1560, 0
      %v1629 = vsel %vm1588, %v1561, 0
      %v1632 = vsel %vm1588, %v1562, 0
      %v1635 = vsel %vm1588, %v1563, 0
      %vm1637 = vcmask 1041408
      %v1639 = vsel %vm1637, %v1585, 0
      %1641 = vmatpush.bf16.msra.mxu0 0
      %1642 = vmatpush.bf16.msra.mxu0 0
      %1643 = vmatpush.bf16.msra.mxu0 0
      %1644 = vmatpush.bf16.msra.mxu0 0
      %1645 = vmatpush.bf16.msra.mxu0 0
      %1646 = vmatpush.bf16.msra.mxu0 %v1639
      %1647 = vmatpush.bf16.msra.mxu0 %v1584
      %1648 = vmatpush.bf16.msra.mxu0 %v1583
      %1649 = vmatmul.bf16.gmra.mxu0 %v1590
      %v1650 = vpop.f32.mrf.mxu0
      %v1651 = vadd.f32 %v1571, %v1650
      %v1652 = vpop.f32.mrf.mxu0
      %v1653 = vadd.f32 %v1571, %v1652
      %1654 = vmatmul.bf16.gmra.mxu0 %v1593
      %v1655 = vpop.f32.mrf.mxu0
      %v1656 = vadd.f32 %v1571, %v1655
      %v1657 = vpop.f32.mrf.mxu0
      %v1658 = vadd.f32 %v1571, %v1657
      %1659 = vmatmul.bf16.gmra.mxu0 %v1596
      %v1660 = vpop.f32.mrf.mxu0
      %v1661 = vadd.f32 %v1571, %v1660
      %v1662 = vpop.f32.mrf.mxu0
      %v1663 = vadd.f32 %v1571, %v1662
      %1664 = vmatmul.bf16.gmra.mxu0 %v1599
      %v1665 = vpop.f32.mrf.mxu0
      %v1666 = vadd.f32 %v1571, %v1665
      %v1667 = vpop.f32.mrf.mxu0
      %v1668 = vadd.f32 %v1571, %v1667
      %1669 = vmatmul.bf16.gmra.mxu0 %v1602
      %v1670 = vpop.f32.mrf.mxu0
      %v1671 = vadd.f32 %v1571, %v1670
      %v1672 = vpop.f32.mrf.mxu0
      %v1673 = vadd.f32 %v1571, %v1672
      %1674 = vmatmul.bf16.gmra.mxu0 %v1605
      %v1675 = vpop.f32.mrf.mxu0
      %v1676 = vadd.f32 %v1571, %v1675
      %v1677 = vpop.f32.mrf.mxu0
      %v1678 = vadd.f32 %v1571, %v1677
      %1679 = vmatmul.bf16.gmra.mxu0 %v1608
      %v1680 = vpop.f32.mrf.mxu0
      %v1681 = vadd.f32 %v1571, %v1680
      %v1682 = vpop.f32.mrf.mxu0
      %v1683 = vadd.f32 %v1571, %v1682
      %1684 = vmatmul.bf16.gmra.mxu0 %v1611
      %v1685 = vpop.f32.mrf.mxu0
      %v1686 = vadd.f32 %v1571, %v1685
      %v1687 = vpop.f32.mrf.mxu0
      %v1688 = vadd.f32 %v1571, %v1687
      %1689 = vmatmul.bf16.gmra.mxu0 %v1614
      %v1690 = vpop.f32.mrf.mxu0
      %v1691 = vadd.f32 %v1571, %v1690
      %v1692 = vpop.f32.mrf.mxu0
      %v1693 = vadd.f32 %v1571, %v1692
      %1694 = vmatmul.bf16.gmra.mxu0 %v1617
      %v1695 = vpop.f32.mrf.mxu0
      %v1696 = vadd.f32 %v1571, %v1695
      %v1697 = vpop.f32.mrf.mxu0
      %v1698 = vadd.f32 %v1571, %v1697
      %1699 = vmatmul.bf16.gmra.mxu0 %v1620
      %v1700 = vpop.f32.mrf.mxu0
      %v1701 = vadd.f32 %v1571, %v1700
      %v1702 = vpop.f32.mrf.mxu0
      %v1703 = vadd.f32 %v1571, %v1702
      %1704 = vmatmul.bf16.gmra.mxu0 %v1623
      %v1705 = vpop.f32.mrf.mxu0
      %v1706 = vadd.f32 %v1571, %v1705
      %v1707 = vpop.f32.mrf.mxu0
      %v1708 = vadd.f32 %v1571, %v1707
      %1709 = vmatmul.bf16.gmra.mxu0 %v1626
      %v1710 = vpop.f32.mrf.mxu0
      %v1711 = vadd.f32 %v1571, %v1710
      %v1712 = vpop.f32.mrf.mxu0
      %v1713 = vadd.f32 %v1571, %v1712
      %1714 = vmatmul.bf16.gmra.mxu0 %v1629
      %v1715 = vpop.f32.mrf.mxu0
      %v1716 = vadd.f32 %v1571, %v1715
      %v1717 = vpop.f32.mrf.mxu0
      %v1718 = vadd.f32 %v1571, %v1717
      %1719 = vmatmul.bf16.gmra.mxu0 %v1632
      %v1720 = vpop.f32.mrf.mxu0
      %v1721 = vadd.f32 %v1571, %v1720
      %v1722 = vpop.f32.mrf.mxu0
      %v1723 = vadd.f32 %v1571, %v1722
      %1724 = vmatmul.bf16.gmra.mxu0 %v1635
      %v1725 = vpop.f32.mrf.mxu0
      %v1726 = vadd.f32 %v1571, %v1725
      %v1727 = vpop.f32.mrf.mxu0
      %v1728 = vadd.f32 %v1571, %v1727
      %1729 = vdwg.mxu0
      %v1730 = vmax.f32 %v1651, 0.0
      %v1731 = vmax.f32 %v1653, 0.0
      %v1732 = vmax.f32 %v1656, 0.0
      %v1733 = vmax.f32 %v1658, 0.0
      %v1734 = vmax.f32 %v1661, 0.0
      %v1735 = vmax.f32 %v1663, 0.0
      %v1736 = vmax.f32 %v1666, 0.0
      %v1737 = vmax.f32 %v1668, 0.0
      %v1738 = vmax.f32 %v1671, 0.0
      %v1739 = vmax.f32 %v1673, 0.0
      %v1740 = vmax.f32 %v1676, 0.0
      %v1741 = vmax.f32 %v1678, 0.0
      %v1742 = vmax.f32 %v1681, 0.0
      %v1743 = vmax.f32 %v1683, 0.0
      %v1744 = vmax.f32 %v1686, 0.0
      %v1745 = vmax.f32 %v1688, 0.0
      %v1746 = vmax.f32 %v1691, 0.0
      %v1747 = vmax.f32 %v1693, 0.0
      %v1748 = vmax.f32 %v1696, 0.0
      %v1749 = vmax.f32 %v1698, 0.0
      %v1750 = vmax.f32 %v1701, 0.0
      %v1751 = vmax.f32 %v1703, 0.0
      %v1752 = vmax.f32 %v1706, 0.0
      %v1753 = vmax.f32 %v1708, 0.0
      %v1754 = vmax.f32 %v1711, 0.0
      %v1755 = vmax.f32 %v1713, 0.0
      %v1756 = vmax.f32 %v1716, 0.0
      %v1757 = vmax.f32 %v1718, 0.0
      %v1758 = vmax.f32 %v1721, 0.0
      %v1759 = vmax.f32 %v1723, 0.0
      %v1760 = vmax.f32 %v1726, 0.0
      %v1761 = vmax.f32 %v1728, 0.0
      %1762 = vst.msk [vmem:[#allocation2] sm:$0xff] %vm1317, 0.0
      %1763 = vst.msk [vmem:[#allocation2 + $0x8] sm:$0xff] %vm1317, 0.0
      %vm1764 = vcmask 58368
      %1765 = vst.msk [vmem:[#allocation2 + $0x10] sm:$0x3] %vm1764, 0.0
      %s1766 = scalar_lea.vmem [#allocation2], 408
      %1767 = vst.msk [vmem:[%s1766] sm:$0xff] %vm1317, 0.0
      %1768 = vst.msk [vmem:[%s1766 + $0x8] sm:$0xff] %vm1317, 0.0
      %1769 = vst.msk [vmem:[%s1766 + $0x10] sm:$0x3] %vm1764, 0.0
      %vm1770 = vcmask 57344
      %1771 = vst.msk [vmem:[#allocation2] sm:$0x1] %vm1770, 0.0
      %1772 = vst.msk [vmem:[#allocation2 + $0x18] sm:$0x1] %vm1770, 0.0
      %1773 = vst.msk [vmem:[#allocation2 + $0x30] sm:$0x1] %vm1770, 0.0
      %1774 = vst.msk [vmem:[#allocation2 + $0x48] sm:$0x1] %vm1770, 0.0
      %1775 = vst.msk [vmem:[#allocation2 + $0x60] sm:$0x1] %vm1770, 0.0
      %1776 = vst.msk [vmem:[#allocation2 + $0x78] sm:$0x1] %vm1770, 0.0
      %1777 = vst.msk [vmem:[#allocation2 + $0x90] sm:$0x1] %vm1770, 0.0
      %1778 = vst.msk [vmem:[#allocation2 + $0xa8] sm:$0x1] %vm1770, 0.0
      %1779 = vst.msk [vmem:[#allocation2 + $0xc0] sm:$0x1] %vm1770, 0.0
      %1780 = vst.msk [vmem:[#allocation2 + $0xd8] sm:$0x1] %vm1770, 0.0
      %1781 = vst.msk [vmem:[#allocation2 + $0xf0] sm:$0x1] %vm1770, 0.0
      %1782 = vst.msk [vmem:[#allocation2 + $0x108] sm:$0x1] %vm1770, 0.0
      %1783 = vst.msk [vmem:[#allocation2 + $0x120] sm:$0x1] %vm1770, 0.0
      %1784 = vst.msk [vmem:[#allocation2 + $0x138] sm:$0x1] %vm1770, 0.0
      %1785 = vst.msk [vmem:[#allocation2 + $0x150] sm:$0x1] %vm1770, 0.0
      %1786 = vst.msk [vmem:[#allocation2 + $0x168] sm:$0x1] %vm1770, 0.0
      %1787 = vst.msk [vmem:[#allocation2 + $0x180] sm:$0x1] %vm1770, 0.0
      %1788 = vst.msk [vmem:[#allocation2 + $0x198] sm:$0x1] %vm1770, 0.0
      %1789 = vst.msk [vmem:[#allocation2 + $0x11] sm:$0x1] %vm1770, 0.0
      %1790 = vst.msk [vmem:[#allocation2 + $0x29] sm:$0x1] %vm1770, 0.0
      %1791 = vst.msk [vmem:[#allocation2 + $0x41] sm:$0x1] %vm1770, 0.0
      %1792 = vst.msk [vmem:[#allocation2 + $0x59] sm:$0x1] %vm1770, 0.0
      %1793 = vst.msk [vmem:[#allocation2 + $0x71] sm:$0x1] %vm1770, 0.0
      %1794 = vst.msk [vmem:[#allocation2 + $0x89] sm:$0x1] %vm1770, 0.0
      %1795 = vst.msk [vmem:[#allocation2 + $0xa1] sm:$0x1] %vm1770, 0.0
      %1796 = vst.msk [vmem:[#allocation2 + $0xb9] sm:$0x1] %vm1770, 0.0
      %1797 = vst.msk [vmem:[#allocation2 + $0xd1] sm:$0x1] %vm1770, 0.0
      %1798 = vst.msk [vmem:[#allocation2 + $0xe9] sm:$0x1] %vm1770, 0.0
      %1799 = vst.msk [vmem:[#allocation2 + $0x101] sm:$0x1] %vm1770, 0.0
      %1800 = vst.msk [vmem:[#allocation2 + $0x119] sm:$0x1] %vm1770, 0.0
      %1801 = vst.msk [vmem:[#allocation2 + $0x131] sm:$0x1] %vm1770, 0.0
      %1802 = vst.msk [vmem:[#allocation2 + $0x149] sm:$0x1] %vm1770, 0.0
      %1803 = vst.msk [vmem:[#allocation2 + $0x161] sm:$0x1] %vm1770, 0.0
      %1804 = vst.msk [vmem:[#allocation2 + $0x179] sm:$0x1] %vm1770, 0.0
      %1805 = vst.msk [vmem:[#allocation2 + $0x191] sm:$0x1] %vm1770, 0.0
      %1806 = vst.msk [vmem:[#allocation2 + $0x1a9] sm:$0x1] %vm1770, 0.0
      %s1807 = scalar_lea.vmem [#allocation2], 24
      %1808 = vst.msk [vmem:[%s1807 + $0x1] sm:$0xff] %vm1317, %v1730
      %1809 = vst.msk [vmem:[%s1807 + $0x9] sm:$0xff] %vm1317, %v1731
      %1810 = vst.msk [vmem:[%s1807 + $0x19] sm:$0xff] %vm1317, %v1732
      %1811 = vst.msk [vmem:[%s1807 + $0x21] sm:$0xff] %vm1317, %v1733
      %1812 = vst.msk [vmem:[%s1807 + $0x31] sm:$0xff] %vm1317, %v1734
      %1813 = vst.msk [vmem:[%s1807 + $0x39] sm:$0xff] %vm1317, %v1735
      %1814 = vst.msk [vmem:[%s1807 + $0x49] sm:$0xff] %vm1317, %v1736
      %1815 = vst.msk [vmem:[%s1807 + $0x51] sm:$0xff] %vm1317, %v1737
      %1816 = vst.msk [vmem:[%s1807 + $0x61] sm:$0xff] %vm1317, %v1738
      %1817 = vst.msk [vmem:[%s1807 + $0x69] sm:$0xff] %vm1317, %v1739
      %1818 = vst.msk [vmem:[%s1807 + $0x79] sm:$0xff] %vm1317, %v1740
      %1819 = vst.msk [vmem:[%s1807 + $0x81] sm:$0xff] %vm1317, %v1741
      %1820 = vst.msk [vmem:[%s1807 + $0x91] sm:$0xff] %vm1317, %v1742
      %1821 = vst.msk [vmem:[%s1807 + $0x99] sm:$0xff] %vm1317, %v1743
      %1822 = vst.msk [vmem:[%s1807 + $0xa9] sm:$0xff] %vm1317, %v1744
      %1823 = vst.msk [vmem:[%s1807 + $0xb1] sm:$0xff] %vm1317, %v1745
      %1824 = vst.msk [vmem:[%s1807 + $0xc1] sm:$0xff] %vm1317, %v1746
      %1825 = vst.msk [vmem:[%s1807 + $0xc9] sm:$0xff] %vm1317, %v1747
      %1826 = vst.msk [vmem:[%s1807 + $0xd9] sm:$0xff] %vm1317, %v1748
      %1827 = vst.msk [vmem:[%s1807 + $0xe1] sm:$0xff] %vm1317, %v1749
      %1828 = vst.msk [vmem:[%s1807 + $0xf1] sm:$0xff] %vm1317, %v1750
      %1829 = vst.msk [vmem:[%s1807 + $0xf9] sm:$0xff] %vm1317, %v1751
      %1830 = vst.msk [vmem:[%s1807 + $0x109] sm:$0xff] %vm1317, %v1752
      %1831 = vst.msk [vmem:[%s1807 + $0x111] sm:$0xff] %vm1317, %v1753
      %1832 = vst.msk [vmem:[%s1807 + $0x121] sm:$0xff] %vm1317, %v1754
      %1833 = vst.msk [vmem:[%s1807 + $0x129] sm:$0xff] %vm1317, %v1755
      %1834 = vst.msk [vmem:[%s1807 + $0x139] sm:$0xff] %vm1317, %v1756
      %1835 = vst.msk [vmem:[%s1807 + $0x141] sm:$0xff] %vm1317, %v1757
      %1836 = vst.msk [vmem:[%s1807 + $0x151] sm:$0xff] %vm1317, %v1758
      %1837 = vst.msk [vmem:[%s1807 + $0x159] sm:$0xff] %vm1317, %v1759
      %1838 = vst.msk [vmem:[%s1807 + $0x169] sm:$0xff] %vm1317, %v1760
      %1839 = vst.msk [vmem:[%s1807 + $0x171] sm:$0xff] %vm1317, %v1761
      %v1840 = vld [vmem:[#allocation2] sm:$0xff]
      %v1841 = vld [vmem:[#allocation2 + $0x8] sm:$0xff]
      %v1842 = vld [vmem:[#allocation2 + $0x10] sm:$0x3]
      %v1843 = vld [vmem:[#allocation2 + $0x18] sm:$0xff]
      %v1844 = vld [vmem:[#allocation2 + $0x20] sm:$0xff]
      %v1845 = vld [vmem:[#allocation2 + $0x28] sm:$0x3]
      %v1846 = vld [vmem:[#allocation2 + $0x30] sm:$0xff]
      %v1847 = vld [vmem:[#allocation2 + $0x38] sm:$0xff]
      %v1848 = vld [vmem:[#allocation2 + $0x40] sm:$0x3]
      %v1849 = vld [vmem:[#allocation2 + $0x48] sm:$0xff]
      %v1850 = vld [vmem:[#allocation2 + $0x50] sm:$0xff]
      %v1851 = vld [vmem:[#allocation2 + $0x58] sm:$0x3]
      %v1852 = vld [vmem:[#allocation2 + $0x60] sm:$0xff]
      %v1853 = vld [vmem:[#allocation2 + $0x68] sm:$0xff]
      %v1854 = vld [vmem:[#allocation2 + $0x70] sm:$0x3]
      %v1855 = vld [vmem:[#allocation2 + $0x78] sm:$0xff]
      %v1856 = vld [vmem:[#allocation2 + $0x80] sm:$0xff]
      %v1857 = vld [vmem:[#allocation2 + $0x88] sm:$0x3]
      %v1858 = vld [vmem:[#allocation2 + $0x90] sm:$0xff]
      %v1859 = vld [vmem:[#allocation2 + $0x98] sm:$0xff]
      %v1860 = vld [vmem:[#allocation2 + $0xa0] sm:$0x3]
      %v1861 = vld [vmem:[#allocation2 + $0xa8] sm:$0xff]
      %v1862 = vld [vmem:[#allocation2 + $0xb0] sm:$0xff]
      %v1863 = vld [vmem:[#allocation2 + $0xb8] sm:$0x3]
      %v1864 = vld [vmem:[#allocation2 + $0xc0] sm:$0xff]
      %v1865 = vld [vmem:[#allocation2 + $0xc8] sm:$0xff]
      %v1866 = vld [vmem:[#allocation2 + $0xd0] sm:$0x3]
      %v1867 = vld [vmem:[#allocation2 + $0xd8] sm:$0xff]
      %v1868 = vld [vmem:[#allocation2 + $0xe0] sm:$0xff]
      %v1869 = vld [vmem:[#allocation2 + $0xe8] sm:$0x3]
      %v1870 = vld [vmem:[#allocation2 + $0xf0] sm:$0xff]
      %v1871 = vld [vmem:[#allocation2 + $0xf8] sm:$0xff]
      %v1872 = vld [vmem:[#allocation2 + $0x100] sm:$0x3]
      %v1873 = vld [vmem:[#allocation2 + $0x108] sm:$0xff]
      %v1874 = vld [vmem:[#allocation2 + $0x110] sm:$0xff]
      %v1875 = vld [vmem:[#allocation2 + $0x118] sm:$0x3]
      %v1876 = vld [vmem:[#allocation2 + $0x120] sm:$0xff]
      %v1877 = vld [vmem:[#allocation2 + $0x128] sm:$0xff]
      %v1878 = vld [vmem:[#allocation2 + $0x130] sm:$0x3]
      %v1879 = vld [vmem:[#allocation2 + $0x138] sm:$0xff]
      %v1880 = vld [vmem:[#allocation2 + $0x140] sm:$0xff]
      %v1881 = vld [vmem:[#allocation2 + $0x148] sm:$0x3]
      %v1882 = vld [vmem:[#allocation2 + $0x150] sm:$0xff]
      %v1883 = vld [vmem:[#allocation2 + $0x158] sm:$0xff]
      %v1884 = vld [vmem:[#allocation2 + $0x160] sm:$0x3]
      %v1885 = vld [vmem:[#allocation2 + $0x168] sm:$0xff]
      %v1886 = vld [vmem:[#allocation2 + $0x170] sm:$0xff]
      %v1887 = vld [vmem:[#allocation2 + $0x178] sm:$0x3]
      %v1888 = vld [vmem:[#allocation2 + $0x180] sm:$0xff]
      %v1889 = vld [vmem:[#allocation2 + $0x188] sm:$0xff]
      %v1890 = vld [vmem:[#allocation2 + $0x190] sm:$0x3]
      %v1891 = vld [vmem:[#allocation2 + $0x198] sm:$0xff]
      %v1892 = vld [vmem:[#allocation2 + $0x1a0] sm:$0xff]
      %v1893 = vld [vmem:[#allocation2 + $0x1a8] sm:$0x3]
      %v1942 = vrot.slane %v1840, 1
      %v1943 = vrot.slane %v1841, 1
      %v1944 = vsel %vm328, %v1942, %v1943
      %v1945 = vrot.slane %v1842, 1
      %v1946 = vsel %vm328, %v1943, %v1945
      %v1947 = vrot.slane %v1843, 1
      %v1948 = vrot.slane %v1844, 1
      %v1949 = vsel %vm328, %v1947, %v1948
      %v1950 = vrot.slane %v1845, 1
      %v1951 = vsel %vm328, %v1948, %v1950
      %v1952 = vrot.slane %v1846, 1
      %v1953 = vrot.slane %v1847, 1
      %v1954 = vsel %vm328, %v1952, %v1953
      %v1955 = vrot.slane %v1848, 1
      %v1956 = vsel %vm328, %v1953, %v1955
      %v1957 = vrot.slane %v1849, 1
      %v1958 = vrot.slane %v1850, 1
      %v1959 = vsel %vm328, %v1957, %v1958
      %v1960 = vrot.slane %v1851, 1
      %v1961 = vsel %vm328, %v1958, %v1960
      %v1962 = vrot.slane %v1852, 1
      %v1963 = vrot.slane %v1853, 1
      %v1964 = vsel %vm328, %v1962, %v1963
      %v1965 = vrot.slane %v1854, 1
      %v1966 = vsel %vm328, %v1963, %v1965
      %v1967 = vrot.slane %v1855, 1
      %v1968 = vrot.slane %v1856, 1
      %v1969 = vsel %vm328, %v1967, %v1968
      %v1970 = vrot.slane %v1857, 1
      %v1971 = vsel %vm328, %v1968, %v1970
      %v1972 = vrot.slane %v1858, 1
      %v1973 = vrot.slane %v1859, 1
      %v1974 = vsel %vm328, %v1972, %v1973
      %v1975 = vrot.slane %v1860, 1
      %v1976 = vsel %vm328, %v1973, %v1975
      %v1977 = vrot.slane %v1861, 1
      %v1978 = vrot.slane %v1862, 1
      %v1979 = vsel %vm328, %v1977, %v1978
      %v1980 = vrot.slane %v1863, 1
      %v1981 = vsel %vm328, %v1978, %v1980
      %v1982 = vrot.slane %v1864, 1
      %v1983 = vrot.slane %v1865, 1
      %v1984 = vsel %vm328, %v1982, %v1983
      %v1985 = vrot.slane %v1866, 1
      %v1986 = vsel %vm328, %v1983, %v1985
      %v1987 = vrot.slane %v1867, 1
      %v1988 = vrot.slane %v1868, 1
      %v1989 = vsel %vm328, %v1987, %v1988
      %v1990 = vrot.slane %v1869, 1
      %v1991 = vsel %vm328, %v1988, %v1990
      %v1992 = vrot.slane %v1870, 1
      %v1993 = vrot.slane %v1871, 1
      %v1994 = vsel %vm328, %v1992, %v1993
      %v1995 = vrot.slane %v1872, 1
      %v1996 = vsel %vm328, %v1993, %v1995
      %v1997 = vrot.slane %v1873, 1
      %v1998 = vrot.slane %v1874, 1
      %v1999 = vsel %vm328, %v1997, %v1998
      %v2000 = vrot.slane %v1875, 1
      %v2001 = vsel %vm328, %v1998, %v2000
      %v2002 = vrot.slane %v1876, 1
      %v2003 = vrot.slane %v1877, 1
      %v2004 = vsel %vm328, %v2002, %v2003
      %v2005 = vrot.slane %v1878, 1
      %v2006 = vsel %vm328, %v2003, %v2005
      %v2007 = vrot.slane %v1879, 1
      %v2008 = vrot.slane %v1880, 1
      %v2009 = vsel %vm328, %v2007, %v2008
      %v2010 = vrot.slane %v1881, 1
      %v2011 = vsel %vm328, %v2008, %v2010
      %v2012 = vrot.slane %v1882, 1
      %v2013 = vrot.slane %v1883, 1
      %v2014 = vsel %vm328, %v2012, %v2013
      %v2015 = vrot.slane %v1884, 1
      %v2016 = vsel %vm328, %v2013, %v2015
      %v2017 = vrot.slane %v1885, 1
      %v2018 = vrot.slane %v1886, 1
      %v2019 = vsel %vm328, %v2017, %v2018
      %v2020 = vrot.slane %v1887, 1
      %v2021 = vsel %vm328, %v2018, %v2020
      %v2022 = vrot.slane %v1840, 2
      %v2023 = vrot.slane %v1841, 2
      %v2024 = vsel %vm409, %v2022, %v2023
      %v2025 = vrot.slane %v1842, 2
      %v2026 = vsel %vm409, %v2023, %v2025
      %v2027 = vrot.slane %v1843, 2
      %v2028 = vrot.slane %v1844, 2
      %v2029 = vsel %vm409, %v2027, %v2028
      %v2030 = vrot.slane %v1845, 2
      %v2031 = vsel %vm409, %v2028, %v2030
      %v2032 = vrot.slane %v1846, 2
      %v2033 = vrot.slane %v1847, 2
      %v2034 = vsel %vm409, %v2032, %v2033
      %v2035 = vrot.slane %v1848, 2
      %v2036 = vsel %vm409, %v2033, %v2035
      %v2037 = vrot.slane %v1849, 2
      %v2038 = vrot.slane %v1850, 2
      %v2039 = vsel %vm409, %v2037, %v2038
      %v2040 = vrot.slane %v1851, 2
      %v2041 = vsel %vm409, %v2038, %v2040
      %v2042 = vrot.slane %v1852, 2
      %v2043 = vrot.slane %v1853, 2
      %v2044 = vsel %vm409, %v2042, %v2043
      %v2045 = vrot.slane %v1854, 2
      %v2046 = vsel %vm409, %v2043, %v2045
      %v2047 = vrot.slane %v1855, 2
      %v2048 = vrot.slane %v1856, 2
      %v2049 = vsel %vm409, %v2047, %v2048
      %v2050 = vrot.slane %v1857, 2
      %v2051 = vsel %vm409, %v2048, %v2050
      %v2052 = vrot.slane %v1858, 2
      %v2053 = vrot.slane %v1859, 2
      %v2054 = vsel %vm409, %v2052, %v2053
      %v2055 = vrot.slane %v1860, 2
      %v2056 = vsel %vm409, %v2053, %v2055
      %v2057 = vrot.slane %v1861, 2
      %v2058 = vrot.slane %v1862, 2
      %v2059 = vsel %vm409, %v2057, %v2058
      %v2060 = vrot.slane %v1863, 2
      %v2061 = vsel %vm409, %v2058, %v2060
      %v2062 = vrot.slane %v1864, 2
      %v2063 = vrot.slane %v1865, 2
      %v2064 = vsel %vm409, %v2062, %v2063
      %v2065 = vrot.slane %v1866, 2
      %v2066 = vsel %vm409, %v2063, %v2065
      %v2067 = vrot.slane %v1867, 2
      %v2068 = vrot.slane %v1868, 2
      %v2069 = vsel %vm409, %v2067, %v2068
      %v2070 = vrot.slane %v1869, 2
      %v2071 = vsel %vm409, %v2068, %v2070
      %v2072 = vrot.slane %v1870, 2
      %v2073 = vrot.slane %v1871, 2
      %v2074 = vsel %vm409, %v2072, %v2073
      %v2075 = vrot.slane %v1872, 2
      %v2076 = vsel %vm409, %v2073, %v2075
      %v2077 = vrot.slane %v1873, 2
      %v2078 = vrot.slane %v1874, 2
      %v2079 = vsel %vm409, %v2077, %v2078
      %v2080 = vrot.slane %v1875, 2
      %v2081 = vsel %vm409, %v2078, %v2080
      %v2082 = vrot.slane %v1876, 2
      %v2083 = vrot.slane %v1877, 2
      %v2084 = vsel %vm409, %v2082, %v2083
      %v2085 = vrot.slane %v1878, 2
      %v2086 = vsel %vm409, %v2083, %v2085
      %v2087 = vrot.slane %v1879, 2
      %v2088 = vrot.slane %v1880, 2
      %v2089 = vsel %vm409, %v2087, %v2088
      %v2090 = vrot.slane %v1881, 2
      %v2091 = vsel %vm409, %v2088, %v2090
      %v2092 = vrot.slane %v1882, 2
      %v2093 = vrot.slane %v1883, 2
      %v2094 = vsel %vm409, %v2092, %v2093
      %v2095 = vrot.slane %v1884, 2
      %v2096 = vsel %vm409, %v2093, %v2095
      %v2097 = vrot.slane %v1885, 2
      %v2098 = vrot.slane %v1886, 2
      %v2099 = vsel %vm409, %v2097, %v2098
      %v2100 = vrot.slane %v1887, 2
      %v2101 = vsel %vm409, %v2098, %v2100
      %v2105 = vrot.slane %v1888, 1
      %v2106 = vrot.slane %v1889, 1
      %v2107 = vsel %vm328, %v2105, %v2106
      %v2108 = vrot.slane %v1890, 1
      %v2109 = vsel %vm328, %v2106, %v2108
      %v2110 = vrot.slane %v1888, 2
      %v2111 = vrot.slane %v1889, 2
      %v2112 = vsel %vm409, %v2110, %v2111
      %v2113 = vrot.slane %v1890, 2
      %v2114 = vsel %vm409, %v2111, %v2113
      %v2118 = vrot.slane %v1891, 1
      %v2119 = vrot.slane %v1892, 1
      %v2120 = vsel %vm328, %v2118, %v2119
      %v2121 = vrot.slane %v1893, 1
      %v2122 = vsel %vm328, %v2119, %v2121
      %v2123 = vrot.slane %v1891, 2
      %v2124 = vrot.slane %v1892, 2
      %v2125 = vsel %vm409, %v2123, %v2124
      %v2126 = vrot.slane %v1893, 2
      %v2127 = vsel %vm409, %v2124, %v2126
      %2128 = vrot.lane.b32.xlu0 %v1944, 8
      %v2129 = vpop.permute.xlu0 %2128
      %2130 = vrot.lane.b32.xlu0 %v1946, 8
      %v2131 = vpop.permute.xlu0 %2130
      %2132 = vrot.lane.b32.xlu0 %v1949, 8
      %v2133 = vpop.permute.xlu0 %2132
      %2134 = vrot.lane.b32.xlu0 %v1951, 8
      %v2135 = vpop.permute.xlu0 %2134
      %2136 = vrot.lane.b32.xlu0 %v1954, 8
      %v2137 = vpop.permute.xlu0 %2136
      %2138 = vrot.lane.b32.xlu0 %v1956, 8
      %v2139 = vpop.permute.xlu0 %2138
      %2140 = vrot.lane.b32.xlu0 %v1959, 8
      %v2141 = vpop.permute.xlu0 %2140
      %2142 = vrot.lane.b32.xlu0 %v1961, 8
      %v2143 = vpop.permute.xlu0 %2142
      %2144 = vrot.lane.b32.xlu0 %v1964, 8
      %v2145 = vpop.permute.xlu0 %2144
      %2146 = vrot.lane.b32.xlu0 %v1966, 8
      %v2147 = vpop.permute.xlu0 %2146
      %2148 = vrot.lane.b32.xlu0 %v1969, 8
      %v2149 = vpop.permute.xlu0 %2148
      %2150 = vrot.lane.b32.xlu0 %v1971, 8
      %v2151 = vpop.permute.xlu0 %2150
      %2152 = vrot.lane.b32.xlu0 %v1974, 8
      %v2153 = vpop.permute.xlu0 %2152
      %2154 = vrot.lane.b32.xlu0 %v1976, 8
      %v2155 = vpop.permute.xlu0 %2154
      %2156 = vrot.lane.b32.xlu0 %v1979, 8
      %v2157 = vpop.permute.xlu0 %2156
      %2158 = vrot.lane.b32.xlu0 %v1981, 8
      %v2159 = vpop.permute.xlu0 %2158
      %2160 = vrot.lane.b32.xlu0 %v1984, 8
      %v2161 = vpop.permute.xlu0 %2160
      %2162 = vrot.lane.b32.xlu0 %v1986, 8
      %v2163 = vpop.permute.xlu0 %2162
      %2164 = vrot.lane.b32.xlu0 %v1989, 8
      %v2165 = vpop.permute.xlu0 %2164
      %2166 = vrot.lane.b32.xlu0 %v1991, 8
      %v2167 = vpop.permute.xlu0 %2166
      %2168 = vrot.lane.b32.xlu0 %v1994, 8
      %v2169 = vpop.permute.xlu0 %2168
      %2170 = vrot.lane.b32.xlu0 %v1996, 8
      %v2171 = vpop.permute.xlu0 %2170
      %2172 = vrot.lane.b32.xlu0 %v1999, 8
      %v2173 = vpop.permute.xlu0 %2172
      %2174 = vrot.lane.b32.xlu0 %v2001, 8
      %v2175 = vpop.permute.xlu0 %2174
      %2176 = vrot.lane.b32.xlu0 %v2004, 8
      %v2177 = vpop.permute.xlu0 %2176
      %2178 = vrot.lane.b32.xlu0 %v2006, 8
      %v2179 = vpop.permute.xlu0 %2178
      %2180 = vrot.lane.b32.xlu0 %v2009, 8
      %v2181 = vpop.permute.xlu0 %2180
      %2182 = vrot.lane.b32.xlu0 %v2011, 8
      %v2183 = vpop.permute.xlu0 %2182
      %2184 = vrot.lane.b32.xlu0 %v2014, 8
      %v2185 = vpop.permute.xlu0 %2184
      %2186 = vrot.lane.b32.xlu0 %v2016, 8
      %v2187 = vpop.permute.xlu0 %2186
      %2188 = vrot.lane.b32.xlu0 %v2019, 8
      %v2189 = vpop.permute.xlu0 %2188
      %2190 = vrot.lane.b32.xlu0 %v2021, 8
      %v2191 = vpop.permute.xlu0 %2190
      %2224 = vrot.lane.b32.xlu0 %v2024, 16
      %v2225 = vpop.permute.xlu0 %2224
      %2226 = vrot.lane.b32.xlu0 %v2026, 16
      %v2227 = vpop.permute.xlu0 %2226
      %2228 = vrot.lane.b32.xlu0 %v2029, 16
      %v2229 = vpop.permute.xlu0 %2228
      %2230 = vrot.lane.b32.xlu0 %v2031, 16
      %v2231 = vpop.permute.xlu0 %2230
      %2232 = vrot.lane.b32.xlu0 %v2034, 16
      %v2233 = vpop.permute.xlu0 %2232
      %2234 = vrot.lane.b32.xlu0 %v2036, 16
      %v2235 = vpop.permute.xlu0 %2234
      %2236 = vrot.lane.b32.xlu0 %v2039, 16
      %v2237 = vpop.permute.xlu0 %2236
      %2238 = vrot.lane.b32.xlu0 %v2041, 16
      %v2239 = vpop.permute.xlu0 %2238
      %2240 = vrot.lane.b32.xlu0 %v2044, 16
      %v2241 = vpop.permute.xlu0 %2240
      %2242 = vrot.lane.b32.xlu0 %v2046, 16
      %v2243 = vpop.permute.xlu0 %2242
      %2244 = vrot.lane.b32.xlu0 %v2049, 16
      %v2245 = vpop.permute.xlu0 %2244
      %2246 = vrot.lane.b32.xlu0 %v2051, 16
      %v2247 = vpop.permute.xlu0 %2246
      %2248 = vrot.lane.b32.xlu0 %v2054, 16
      %v2249 = vpop.permute.xlu0 %2248
      %2250 = vrot.lane.b32.xlu0 %v2056, 16
      %v2251 = vpop.permute.xlu0 %2250
      %2252 = vrot.lane.b32.xlu0 %v2059, 16
      %v2253 = vpop.permute.xlu0 %2252
      %2254 = vrot.lane.b32.xlu0 %v2061, 16
      %v2255 = vpop.permute.xlu0 %2254
      %2256 = vrot.lane.b32.xlu0 %v2064, 16
      %v2257 = vpop.permute.xlu0 %2256
      %2258 = vrot.lane.b32.xlu0 %v2066, 16
      %v2259 = vpop.permute.xlu0 %2258
      %2260 = vrot.lane.b32.xlu0 %v2069, 16
      %v2261 = vpop.permute.xlu0 %2260
      %2262 = vrot.lane.b32.xlu0 %v2071, 16
      %v2263 = vpop.permute.xlu0 %2262
      %2264 = vrot.lane.b32.xlu0 %v2074, 16
      %v2265 = vpop.permute.xlu0 %2264
      %2266 = vrot.lane.b32.xlu0 %v2076, 16
      %v2267 = vpop.permute.xlu0 %2266
      %2268 = vrot.lane.b32.xlu0 %v2079, 16
      %v2269 = vpop.permute.xlu0 %2268
      %2270 = vrot.lane.b32.xlu0 %v2081, 16
      %v2271 = vpop.permute.xlu0 %2270
      %2272 = vrot.lane.b32.xlu0 %v2084, 16
      %v2273 = vpop.permute.xlu0 %2272
      %2274 = vrot.lane.b32.xlu0 %v2086, 16
      %v2275 = vpop.permute.xlu0 %2274
      %2276 = vrot.lane.b32.xlu0 %v2089, 16
      %v2277 = vpop.permute.xlu0 %2276
      %2278 = vrot.lane.b32.xlu0 %v2091, 16
      %v2279 = vpop.permute.xlu0 %2278
      %2280 = vrot.lane.b32.xlu0 %v2094, 16
      %v2281 = vpop.permute.xlu0 %2280
      %2282 = vrot.lane.b32.xlu0 %v2096, 16
      %v2283 = vpop.permute.xlu0 %2282
      %2284 = vrot.lane.b32.xlu0 %v2099, 16
      %v2285 = vpop.permute.xlu0 %2284
      %2286 = vrot.lane.b32.xlu0 %v2101, 16
      %v2287 = vpop.permute.xlu0 %2286
      %2320 = vrot.lane.b32.xlu0 %v1843, 24
      %v2321 = vpop.permute.xlu0 %2320
      %2322 = vrot.lane.b32.xlu0 %v1844, 24
      %v2323 = vpop.permute.xlu0 %2322
      %2324 = vrot.lane.b32.xlu0 %v1846, 24
      %v2325 = vpop.permute.xlu0 %2324
      %2326 = vrot.lane.b32.xlu0 %v1847, 24
      %v2327 = vpop.permute.xlu0 %2326
      %2328 = vrot.lane.b32.xlu0 %v1849, 24
      %v2329 = vpop.permute.xlu0 %2328
      %2330 = vrot.lane.b32.xlu0 %v1850, 24
      %v2331 = vpop.permute.xlu0 %2330
      %2332 = vrot.lane.b32.xlu0 %v1852, 24
      %v2333 = vpop.permute.xlu0 %2332
      %2334 = vrot.lane.b32.xlu0 %v1853, 24
      %v2335 = vpop.permute.xlu0 %2334
      %2336 = vrot.lane.b32.xlu0 %v1855, 24
      %v2337 = vpop.permute.xlu0 %2336
      %2338 = vrot.lane.b32.xlu0 %v1856, 24
      %v2339 = vpop.permute.xlu0 %2338
      %2340 = vrot.lane.b32.xlu0 %v1858, 24
      %v2341 = vpop.permute.xlu0 %2340
      %2342 = vrot.lane.b32.xlu0 %v1859, 24
      %v2343 = vpop.permute.xlu0 %2342
      %2344 = vrot.lane.b32.xlu0 %v1861, 24
      %v2345 = vpop.permute.xlu0 %2344
      %2346 = vrot.lane.b32.xlu0 %v1862, 24
      %v2347 = vpop.permute.xlu0 %2346
      %2348 = vrot.lane.b32.xlu0 %v1864, 24
      %v2349 = vpop.permute.xlu0 %2348
      %2350 = vrot.lane.b32.xlu0 %v1865, 24
      %v2351 = vpop.permute.xlu0 %2350
      %2352 = vrot.lane.b32.xlu0 %v1867, 24
      %v2353 = vpop.permute.xlu0 %2352
      %2354 = vrot.lane.b32.xlu0 %v1868, 24
      %v2355 = vpop.permute.xlu0 %2354
      %2356 = vrot.lane.b32.xlu0 %v1870, 24
      %v2357 = vpop.permute.xlu0 %2356
      %2358 = vrot.lane.b32.xlu0 %v1871, 24
      %v2359 = vpop.permute.xlu0 %2358
      %2360 = vrot.lane.b32.xlu0 %v1873, 24
      %v2361 = vpop.permute.xlu0 %2360
      %2362 = vrot.lane.b32.xlu0 %v1874, 24
      %v2363 = vpop.permute.xlu0 %2362
      %2364 = vrot.lane.b32.xlu0 %v1876, 24
      %v2365 = vpop.permute.xlu0 %2364
      %2366 = vrot.lane.b32.xlu0 %v1877, 24
      %v2367 = vpop.permute.xlu0 %2366
      %2368 = vrot.lane.b32.xlu0 %v1879, 24
      %v2369 = vpop.permute.xlu0 %2368
      %2370 = vrot.lane.b32.xlu0 %v1880, 24
      %v2371 = vpop.permute.xlu0 %2370
      %2372 = vrot.lane.b32.xlu0 %v1882, 24
      %v2373 = vpop.permute.xlu0 %2372
      %2374 = vrot.lane.b32.xlu0 %v1883, 24
      %v2375 = vpop.permute.xlu0 %2374
      %2376 = vrot.lane.b32.xlu0 %v1885, 24
      %v2377 = vpop.permute.xlu0 %2376
      %2378 = vrot.lane.b32.xlu0 %v1886, 24
      %v2379 = vpop.permute.xlu0 %2378
      %2380 = vrot.lane.b32.xlu0 %v1888, 24
      %v2381 = vpop.permute.xlu0 %2380
      %2382 = vrot.lane.b32.xlu0 %v1889, 24
      %v2383 = vpop.permute.xlu0 %2382
      %2416 = vrot.lane.b32.xlu0 %v1949, 32
      %v2417 = vpop.permute.xlu0 %2416
      %2418 = vrot.lane.b32.xlu0 %v1951, 32
      %v2419 = vpop.permute.xlu0 %2418
      %2420 = vrot.lane.b32.xlu0 %v1954, 32
      %v2421 = vpop.permute.xlu0 %2420
      %2422 = vrot.lane.b32.xlu0 %v1956, 32
      %v2423 = vpop.permute.xlu0 %2422
      %2424 = vrot.lane.b32.xlu0 %v1959, 32
      %v2425 = vpop.permute.xlu0 %2424
      %2426 = vrot.lane.b32.xlu0 %v1961, 32
      %v2427 = vpop.permute.xlu0 %2426
      %2428 = vrot.lane.b32.xlu0 %v1964, 32
      %v2429 = vpop.permute.xlu0 %2428
      %2430 = vrot.lane.b32.xlu0 %v1966, 32
      %v2431 = vpop.permute.xlu0 %2430
      %2432 = vrot.lane.b32.xlu0 %v1969, 32
      %v2433 = vpop.permute.xlu0 %2432
      %2434 = vrot.lane.b32.xlu0 %v1971, 32
      %v2435 = vpop.permute.xlu0 %2434
      %2436 = vrot.lane.b32.xlu0 %v1974, 32
      %v2437 = vpop.permute.xlu0 %2436
      %2438 = vrot.lane.b32.xlu0 %v1976, 32
      %v2439 = vpop.permute.xlu0 %2438
      %2440 = vrot.lane.b32.xlu0 %v1979, 32
      %v2441 = vpop.permute.xlu0 %2440
      %2442 = vrot.lane.b32.xlu0 %v1981, 32
      %v2443 = vpop.permute.xlu0 %2442
      %2444 = vrot.lane.b32.xlu0 %v1984, 32
      %v2445 = vpop.permute.xlu0 %2444
      %2446 = vrot.lane.b32.xlu0 %v1986, 32
      %v2447 = vpop.permute.xlu0 %2446
      %2448 = vrot.lane.b32.xlu0 %v1989, 32
      %v2449 = vpop.permute.xlu0 %2448
      %2450 = vrot.lane.b32.xlu0 %v1991, 32
      %v2451 = vpop.permute.xlu0 %2450
      %2452 = vrot.lane.b32.xlu0 %v1994, 32
      %v2453 = vpop.permute.xlu0 %2452
      %2454 = vrot.lane.b32.xlu0 %v1996, 32
      %v2455 = vpop.permute.xlu0 %2454
      %2456 = vrot.lane.b32.xlu0 %v1999, 32
      %v2457 = vpop.permute.xlu0 %2456
      %2458 = vrot.lane.b32.xlu0 %v2001, 32
      %v2459 = vpop.permute.xlu0 %2458
      %2460 = vrot.lane.b32.xlu0 %v2004, 32
      %v2461 = vpop.permute.xlu0 %2460
      %2462 = vrot.lane.b32.xlu0 %v2006, 32
      %v2463 = vpop.permute.xlu0 %2462
      %2464 = vrot.lane.b32.xlu0 %v2009, 32
      %v2465 = vpop.permute.xlu0 %2464
      %2466 = vrot.lane.b32.xlu0 %v2011, 32
      %v2467 = vpop.permute.xlu0 %2466
      %2468 = vrot.lane.b32.xlu0 %v2014, 32
      %v2469 = vpop.permute.xlu0 %2468
      %2470 = vrot.lane.b32.xlu0 %v2016, 32
      %v2471 = vpop.permute.xlu0 %2470
      %2472 = vrot.lane.b32.xlu0 %v2019, 32
      %v2473 = vpop.permute.xlu0 %2472
      %2474 = vrot.lane.b32.xlu0 %v2021, 32
      %v2475 = vpop.permute.xlu0 %2474
      %2476 = vrot.lane.b32.xlu0 %v2107, 32
      %v2477 = vpop.permute.xlu0 %2476
      %2478 = vrot.lane.b32.xlu0 %v2109, 32
      %v2479 = vpop.permute.xlu0 %2478
      %2512 = vrot.lane.b32.xlu0 %v2029, 40
      %v2513 = vpop.permute.xlu0 %2512
      %2514 = vrot.lane.b32.xlu0 %v2031, 40
      %v2515 = vpop.permute.xlu0 %2514
      %2516 = vrot.lane.b32.xlu0 %v2034, 40
      %v2517 = vpop.permute.xlu0 %2516
      %2518 = vrot.lane.b32.xlu0 %v2036, 40
      %v2519 = vpop.permute.xlu0 %2518
      %2520 = vrot.lane.b32.xlu0 %v2039, 40
      %v2521 = vpop.permute.xlu0 %2520
      %2522 = vrot.lane.b32.xlu0 %v2041, 40
      %v2523 = vpop.permute.xlu0 %2522
      %2524 = vrot.lane.b32.xlu0 %v2044, 40
      %v2525 = vpop.permute.xlu0 %2524
      %2526 = vrot.lane.b32.xlu0 %v2046, 40
      %v2527 = vpop.permute.xlu0 %2526
      %2528 = vrot.lane.b32.xlu0 %v2049, 40
      %v2529 = vpop.permute.xlu0 %2528
      %2530 = vrot.lane.b32.xlu0 %v2051, 40
      %v2531 = vpop.permute.xlu0 %2530
      %2532 = vrot.lane.b32.xlu0 %v2054, 40
      %v2533 = vpop.permute.xlu0 %2532
      %2534 = vrot.lane.b32.xlu0 %v2056, 40
      %v2535 = vpop.permute.xlu0 %2534
      %2536 = vrot.lane.b32.xlu0 %v2059, 40
      %v2537 = vpop.permute.xlu0 %2536
      %2538 = vrot.lane.b32.xlu0 %v2061, 40
      %v2539 = vpop.permute.xlu0 %2538
      %2540 = vrot.lane.b32.xlu0 %v2064, 40
      %v2541 = vpop.permute.xlu0 %2540
      %2542 = vrot.lane.b32.xlu0 %v2066, 40
      %v2543 = vpop.permute.xlu0 %2542
      %2544 = vrot.lane.b32.xlu0 %v2069, 40
      %v2545 = vpop.permute.xlu0 %2544
      %2546 = vrot.lane.b32.xlu0 %v2071, 40
      %v2547 = vpop.permute.xlu0 %2546
      %2548 = vrot.lane.b32.xlu0 %v2074, 40
      %v2549 = vpop.permute.xlu0 %2548
      %2550 = vrot.lane.b32.xlu0 %v2076, 40
      %v2551 = vpop.permute.xlu0 %2550
      %2552 = vrot.lane.b32.xlu0 %v2079, 40
      %v2553 = vpop.permute.xlu0 %2552
      %2554 = vrot.lane.b32.xlu0 %v2081, 40
      %v2555 = vpop.permute.xlu0 %2554
      %2556 = vrot.lane.b32.xlu0 %v2084, 40
      %v2557 = vpop.permute.xlu0 %2556
      %2558 = vrot.lane.b32.xlu0 %v2086, 40
      %v2559 = vpop.permute.xlu0 %2558
      %2560 = vrot.lane.b32.xlu0 %v2089, 40
      %v2561 = vpop.permute.xlu0 %2560
      %2562 = vrot.lane.b32.xlu0 %v2091, 40
      %v2563 = vpop.permute.xlu0 %2562
      %2564 = vrot.lane.b32.xlu0 %v2094, 40
      %v2565 = vpop.permute.xlu0 %2564
      %2566 = vrot.lane.b32.xlu0 %v2096, 40
      %v2567 = vpop.permute.xlu0 %2566
      %2568 = vrot.lane.b32.xlu0 %v2099, 40
      %v2569 = vpop.permute.xlu0 %2568
      %2570 = vrot.lane.b32.xlu0 %v2101, 40
      %v2571 = vpop.permute.xlu0 %2570
      %2572 = vrot.lane.b32.xlu0 %v2112, 40
      %v2573 = vpop.permute.xlu0 %2572
      %2574 = vrot.lane.b32.xlu0 %v2114, 40
      %v2575 = vpop.permute.xlu0 %2574
      %2608 = vrot.lane.b32.xlu0 %v1846, 48
      %v2609 = vpop.permute.xlu0 %2608
      %2610 = vrot.lane.b32.xlu0 %v1847, 48
      %v2611 = vpop.permute.xlu0 %2610
      %2612 = vrot.lane.b32.xlu0 %v1849, 48
      %v2613 = vpop.permute.xlu0 %2612
      %2614 = vrot.lane.b32.xlu0 %v1850, 48
      %v2615 = vpop.permute.xlu0 %2614
      %2616 = vrot.lane.b32.xlu0 %v1852, 48
      %v2617 = vpop.permute.xlu0 %2616
      %2618 = vrot.lane.b32.xlu0 %v1853, 48
      %v2619 = vpop.permute.xlu0 %2618
      %2620 = vrot.lane.b32.xlu0 %v1855, 48
      %v2621 = vpop.permute.xlu0 %2620
      %2622 = vrot.lane.b32.xlu0 %v1856, 48
      %v2623 = vpop.permute.xlu0 %2622
      %2624 = vrot.lane.b32.xlu0 %v1858, 48
      %v2625 = vpop.permute.xlu0 %2624
      %2626 = vrot.lane.b32.xlu0 %v1859, 48
      %v2627 = vpop.permute.xlu0 %2626
      %2628 = vrot.lane.b32.xlu0 %v1861, 48
      %v2629 = vpop.permute.xlu0 %2628
      %2630 = vrot.lane.b32.xlu0 %v1862, 48
      %v2631 = vpop.permute.xlu0 %2630
      %2632 = vrot.lane.b32.xlu0 %v1864, 48
      %v2633 = vpop.permute.xlu0 %2632
      %2634 = vrot.lane.b32.xlu0 %v1865, 48
      %v2635 = vpop.permute.xlu0 %2634
      %2636 = vrot.lane.b32.xlu0 %v1867, 48
      %v2637 = vpop.permute.xlu0 %2636
      %2638 = vrot.lane.b32.xlu0 %v1868, 48
      %v2639 = vpop.permute.xlu0 %2638
      %2640 = vrot.lane.b32.xlu0 %v1870, 48
      %v2641 = vpop.permute.xlu0 %2640
      %2642 = vrot.lane.b32.xlu0 %v1871, 48
      %v2643 = vpop.permute.xlu0 %2642
      %2644 = vrot.lane.b32.xlu0 %v1873, 48
      %v2645 = vpop.permute.xlu0 %2644
      %2646 = vrot.lane.b32.xlu0 %v1874, 48
      %v2647 = vpop.permute.xlu0 %2646
      %2648 = vrot.lane.b32.xlu0 %v1876, 48
      %v2649 = vpop.permute.xlu0 %2648
      %2650 = vrot.lane.b32.xlu0 %v1877, 48
      %v2651 = vpop.permute.xlu0 %2650
      %2652 = vrot.lane.b32.xlu0 %v1879, 48
      %v2653 = vpop.permute.xlu0 %2652
      %2654 = vrot.lane.b32.xlu0 %v1880, 48
      %v2655 = vpop.permute.xlu0 %2654
      %2656 = vrot.lane.b32.xlu0 %v1882, 48
      %v2657 = vpop.permute.xlu0 %2656
      %2658 = vrot.lane.b32.xlu0 %v1883, 48
      %v2659 = vpop.permute.xlu0 %2658
      %2660 = vrot.lane.b32.xlu0 %v1885, 48
      %v2661 = vpop.permute.xlu0 %2660
      %2662 = vrot.lane.b32.xlu0 %v1886, 48
      %v2663 = vpop.permute.xlu0 %2662
      %2664 = vrot.lane.b32.xlu0 %v1888, 48
      %v2665 = vpop.permute.xlu0 %2664
      %2666 = vrot.lane.b32.xlu0 %v1889, 48
      %v2667 = vpop.permute.xlu0 %2666
      %2668 = vrot.lane.b32.xlu0 %v1891, 48
      %v2669 = vpop.permute.xlu0 %2668
      %2670 = vrot.lane.b32.xlu0 %v1892, 48
      %v2671 = vpop.permute.xlu0 %2670
      %2704 = vrot.lane.b32.xlu0 %v1954, 56
      %v2705 = vpop.permute.xlu0 %2704
      %2706 = vrot.lane.b32.xlu0 %v1956, 56
      %v2707 = vpop.permute.xlu0 %2706
      %2708 = vrot.lane.b32.xlu0 %v1959, 56
      %v2709 = vpop.permute.xlu0 %2708
      %2710 = vrot.lane.b32.xlu0 %v1961, 56
      %v2711 = vpop.permute.xlu0 %2710
      %2712 = vrot.lane.b32.xlu0 %v1964, 56
      %v2713 = vpop.permute.xlu0 %2712
      %2714 = vrot.lane.b32.xlu0 %v1966, 56
      %v2715 = vpop.permute.xlu0 %2714
      %2716 = vrot.lane.b32.xlu0 %v1969, 56
      %v2717 = vpop.permute.xlu0 %2716
      %2718 = vrot.lane.b32.xlu0 %v1971, 56
      %v2719 = vpop.permute.xlu0 %2718
      %2720 = vrot.lane.b32.xlu0 %v1974, 56
      %v2721 = vpop.permute.xlu0 %2720
      %2722 = vrot.lane.b32.xlu0 %v1976, 56
      %v2723 = vpop.permute.xlu0 %2722
      %2724 = vrot.lane.b32.xlu0 %v1979, 56
      %v2725 = vpop.permute.xlu0 %2724
      %2726 = vrot.lane.b32.xlu0 %v1981, 56
      %v2727 = vpop.permute.xlu0 %2726
      %2728 = vrot.lane.b32.xlu0 %v1984, 56
      %v2729 = vpop.permute.xlu0 %2728
      %2730 = vrot.lane.b32.xlu0 %v1986, 56
      %v2731 = vpop.permute.xlu0 %2730
      %2732 = vrot.lane.b32.xlu0 %v1989, 56
      %v2733 = vpop.permute.xlu0 %2732
      %2734 = vrot.lane.b32.xlu0 %v1991, 56
      %v2735 = vpop.permute.xlu0 %2734
      %2736 = vrot.lane.b32.xlu0 %v1994, 56
      %v2737 = vpop.permute.xlu0 %2736
      %2738 = vrot.lane.b32.xlu0 %v1996, 56
      %v2739 = vpop.permute.xlu0 %2738
      %2740 = vrot.lane.b32.xlu0 %v1999, 56
      %v2741 = vpop.permute.xlu0 %2740
      %2742 = vrot.lane.b32.xlu0 %v2001, 56
      %v2743 = vpop.permute.xlu0 %2742
      %2744 = vrot.lane.b32.xlu0 %v2004, 56
      %v2745 = vpop.permute.xlu0 %2744
      %2746 = vrot.lane.b32.xlu0 %v2006, 56
      %v2747 = vpop.permute.xlu0 %2746
      %2748 = vrot.lane.b32.xlu0 %v2009, 56
      %v2749 = vpop.permute.xlu0 %2748
      %2750 = vrot.lane.b32.xlu0 %v2011, 56
      %v2751 = vpop.permute.xlu0 %2750
      %2752 = vrot.lane.b32.xlu0 %v2014, 56
      %v2753 = vpop.permute.xlu0 %2752
      %2754 = vrot.lane.b32.xlu0 %v2016, 56
      %v2755 = vpop.permute.xlu0 %2754
      %2756 = vrot.lane.b32.xlu0 %v2019, 56
      %v2757 = vpop.permute.xlu0 %2756
      %2758 = vrot.lane.b32.xlu0 %v2021, 56
      %v2759 = vpop.permute.xlu0 %2758
      %2760 = vrot.lane.b32.xlu0 %v2107, 56
      %v2761 = vpop.permute.xlu0 %2760
      %2762 = vrot.lane.b32.xlu0 %v2109, 56
      %v2763 = vpop.permute.xlu0 %2762
      %2764 = vrot.lane.b32.xlu0 %v2120, 56
      %v2765 = vpop.permute.xlu0 %2764
      %2766 = vrot.lane.b32.xlu0 %v2122, 56
      %v2767 = vpop.permute.xlu0 %2766
      %2800 = vrot.lane.b32.xlu0 %v2034, 64
      %v2801 = vpop.permute.xlu0 %2800
      %2802 = vrot.lane.b32.xlu0 %v2036, 64
      %v2803 = vpop.permute.xlu0 %2802
      %2804 = vrot.lane.b32.xlu0 %v2039, 64
      %v2805 = vpop.permute.xlu0 %2804
      %2806 = vrot.lane.b32.xlu0 %v2041, 64
      %v2807 = vpop.permute.xlu0 %2806
      %2808 = vrot.lane.b32.xlu0 %v2044, 64
      %v2809 = vpop.permute.xlu0 %2808
      %2810 = vrot.lane.b32.xlu0 %v2046, 64
      %v2811 = vpop.permute.xlu0 %2810
      %2812 = vrot.lane.b32.xlu0 %v2049, 64
      %v2813 = vpop.permute.xlu0 %2812
      %2814 = vrot.lane.b32.xlu0 %v2051, 64
      %v2815 = vpop.permute.xlu0 %2814
      %2816 = vrot.lane.b32.xlu0 %v2054, 64
      %v2817 = vpop.permute.xlu0 %2816
      %2818 = vrot.lane.b32.xlu0 %v2056, 64
      %v2819 = vpop.permute.xlu0 %2818
      %2820 = vrot.lane.b32.xlu0 %v2059, 64
      %v2821 = vpop.permute.xlu0 %2820
      %2822 = vrot.lane.b32.xlu0 %v2061, 64
      %v2823 = vpop.permute.xlu0 %2822
      %2824 = vrot.lane.b32.xlu0 %v2064, 64
      %v2825 = vpop.permute.xlu0 %2824
      %2826 = vrot.lane.b32.xlu0 %v2066, 64
      %v2827 = vpop.permute.xlu0 %2826
      %2828 = vrot.lane.b32.xlu0 %v2069, 64
      %v2829 = vpop.permute.xlu0 %2828
      %2830 = vrot.lane.b32.xlu0 %v2071, 64
      %v2831 = vpop.permute.xlu0 %2830
      %2832 = vrot.lane.b32.xlu0 %v2074, 64
      %v2833 = vpop.permute.xlu0 %2832
      %2834 = vrot.lane.b32.xlu0 %v2076, 64
      %v2835 = vpop.permute.xlu0 %2834
      %2836 = vrot.lane.b32.xlu0 %v2079, 64
      %v2837 = vpop.permute.xlu0 %2836
      %2838 = vrot.lane.b32.xlu0 %v2081, 64
      %v2839 = vpop.permute.xlu0 %2838
      %2840 = vrot.lane.b32.xlu0 %v2084, 64
      %v2841 = vpop.permute.xlu0 %2840
      %2842 = vrot.lane.b32.xlu0 %v2086, 64
      %v2843 = vpop.permute.xlu0 %2842
      %2844 = vrot.lane.b32.xlu0 %v2089, 64
      %v2845 = vpop.permute.xlu0 %2844
      %2846 = vrot.lane.b32.xlu0 %v2091, 64
      %v2847 = vpop.permute.xlu0 %2846
      %2848 = vrot.lane.b32.xlu0 %v2094, 64
      %v2849 = vpop.permute.xlu0 %2848
      %2850 = vrot.lane.b32.xlu0 %v2096, 64
      %v2851 = vpop.permute.xlu0 %2850
      %2852 = vrot.lane.b32.xlu0 %v2099, 64
      %v2853 = vpop.permute.xlu0 %2852
      %2854 = vrot.lane.b32.xlu0 %v2101, 64
      %v2855 = vpop.permute.xlu0 %2854
      %2856 = vrot.lane.b32.xlu0 %v2112, 64
      %v2857 = vpop.permute.xlu0 %2856
      %2858 = vrot.lane.b32.xlu0 %v2114, 64
      %v2859 = vpop.permute.xlu0 %2858
      %2860 = vrot.lane.b32.xlu0 %v2125, 64
      %v2861 = vpop.permute.xlu0 %2860
      %2862 = vrot.lane.b32.xlu0 %v2127, 64
      %v2863 = vpop.permute.xlu0 %2862
      %v2896 = vsel %vm1317, %v1840, %v2129
      %v2897 = vsel %vm1317, %v1841, %v2131
      %v2898 = vsel %vm1317, %v1843, %v2133
      %v2899 = vsel %vm1317, %v1844, %v2135
      %v2900 = vsel %vm1317, %v1846, %v2137
      %v2901 = vsel %vm1317, %v1847, %v2139
      %v2902 = vsel %vm1317, %v1849, %v2141
      %v2903 = vsel %vm1317, %v1850, %v2143
      %v2904 = vsel %vm1317, %v1852, %v2145
      %v2905 = vsel %vm1317, %v1853, %v2147
      %v2906 = vsel %vm1317, %v1855, %v2149
      %v2907 = vsel %vm1317, %v1856, %v2151
      %v2908 = vsel %vm1317, %v1858, %v2153
      %v2909 = vsel %vm1317, %v1859, %v2155
      %v2910 = vsel %vm1317, %v1861, %v2157
      %v2911 = vsel %vm1317, %v1862, %v2159
      %v2912 = vsel %vm1317, %v1864, %v2161
      %v2913 = vsel %vm1317, %v1865, %v2163
      %v2914 = vsel %vm1317, %v1867, %v2165
      %v2915 = vsel %vm1317, %v1868, %v2167
      %v2916 = vsel %vm1317, %v1870, %v2169
      %v2917 = vsel %vm1317, %v1871, %v2171
      %v2918 = vsel %vm1317, %v1873, %v2173
      %v2919 = vsel %vm1317, %v1874, %v2175
      %v2920 = vsel %vm1317, %v1876, %v2177
      %v2921 = vsel %vm1317, %v1877, %v2179
      %v2922 = vsel %vm1317, %v1879, %v2181
      %v2923 = vsel %vm1317, %v1880, %v2183
      %v2924 = vsel %vm1317, %v1882, %v2185
      %v2925 = vsel %vm1317, %v1883, %v2187
      %v2926 = vsel %vm1317, %v1885, %v2189
      %v2927 = vsel %vm1317, %v1886, %v2191
      %v2928 = vsel %vm1383, %v2896, %v2225
      %v2929 = vsel %vm1383, %v2897, %v2227
      %v2930 = vsel %vm1383, %v2898, %v2229
      %v2931 = vsel %vm1383, %v2899, %v2231
      %v2932 = vsel %vm1383, %v2900, %v2233
      %v2933 = vsel %vm1383, %v2901, %v2235
      %v2934 = vsel %vm1383, %v2902, %v2237
      %v2935 = vsel %vm1383, %v2903, %v2239
      %v2936 = vsel %vm1383, %v2904, %v2241
      %v2937 = vsel %vm1383, %v2905, %v2243
      %v2938 = vsel %vm1383, %v2906, %v2245
      %v2939 = vsel %vm1383, %v2907, %v2247
      %v2940 = vsel %vm1383, %v2908, %v2249
      %v2941 = vsel %vm1383, %v2909, %v2251
      %v2942 = vsel %vm1383, %v2910, %v2253
      %v2943 = vsel %vm1383, %v2911, %v2255
      %v2944 = vsel %vm1383, %v2912, %v2257
      %v2945 = vsel %vm1383, %v2913, %v2259
      %v2946 = vsel %vm1383, %v2914, %v2261
      %v2947 = vsel %vm1383, %v2915, %v2263
      %v2948 = vsel %vm1383, %v2916, %v2265
      %v2949 = vsel %vm1383, %v2917, %v2267
      %v2950 = vsel %vm1383, %v2918, %v2269
      %v2951 = vsel %vm1383, %v2919, %v2271
      %v2952 = vsel %vm1383, %v2920, %v2273
      %v2953 = vsel %vm1383, %v2921, %v2275
      %v2954 = vsel %vm1383, %v2922, %v2277
      %v2955 = vsel %vm1383, %v2923, %v2279
      %v2956 = vsel %vm1383, %v2924, %v2281
      %v2957 = vsel %vm1383, %v2925, %v2283
      %v2958 = vsel %vm1383, %v2926, %v2285
      %v2959 = vsel %vm1383, %v2927, %v2287
      %v2960 = vsel %vm1449, %v2928, %v2321
      %v2961 = vsel %vm1449, %v2929, %v2323
      %v2962 = vsel %vm1449, %v2930, %v2325
      %v2963 = vsel %vm1449, %v2931, %v2327
      %v2964 = vsel %vm1449, %v2932, %v2329
      %v2965 = vsel %vm1449, %v2933, %v2331
      %v2966 = vsel %vm1449, %v2934, %v2333
      %v2967 = vsel %vm1449, %v2935, %v2335
      %v2968 = vsel %vm1449, %v2936, %v2337
      %v2969 = vsel %vm1449, %v2937, %v2339
      %v2970 = vsel %vm1449, %v2938, %v2341
      %v2971 = vsel %vm1449, %v2939, %v2343
      %v2972 = vsel %vm1449, %v2940, %v2345
      %v2973 = vsel %vm1449, %v2941, %v2347
      %v2974 = vsel %vm1449, %v2942, %v2349
      %v2975 = vsel %vm1449, %v2943, %v2351
      %v2976 = vsel %vm1449, %v2944, %v2353
      %v2977 = vsel %vm1449, %v2945, %v2355
      %v2978 = vsel %vm1449, %v2946, %v2357
      %v2979 = vsel %vm1449, %v2947, %v2359
      %v2980 = vsel %vm1449, %v2948, %v2361
      %v2981 = vsel %vm1449, %v2949, %v2363
      %v2982 = vsel %vm1449, %v2950, %v2365
      %v2983 = vsel %vm1449, %v2951, %v2367
      %v2984 = vsel %vm1449, %v2952, %v2369
      %v2985 = vsel %vm1449, %v2953, %v2371
      %v2986 = vsel %vm1449, %v2954, %v2373
      %v2987 = vsel %vm1449, %v2955, %v2375
      %v2988 = vsel %vm1449, %v2956, %v2377
      %v2989 = vsel %vm1449, %v2957, %v2379
      %v2990 = vsel %vm1449, %v2958, %v2381
      %v2991 = vsel %vm1449, %v2959, %v2383
      %v2992 = vsel %vm1515, %v2960, %v2417
      %v2993 = vsel %vm1515, %v2961, %v2419
      %v2994 = vsel %vm1515, %v2962, %v2421
      %v2995 = vsel %vm1515, %v2963, %v2423
      %v2996 = vsel %vm1515, %v2964, %v2425
      %v2997 = vsel %vm1515, %v2965, %v2427
      %v2998 = vsel %vm1515, %v2966, %v2429
      %v2999 = vsel %vm1515, %v2967, %v2431
      %v3000 = vsel %vm1515, %v2968, %v2433
      %v3001 = vsel %vm1515, %v2969, %v2435
      %v3002 = vsel %vm1515, %v2970, %v2437
      %v3003 = vsel %vm1515, %v2971, %v2439
      %v3004 = vsel %vm1515, %v2972, %v2441
      %v3005 = vsel %vm1515, %v2973, %v2443
      %v3006 = vsel %vm1515, %v2974, %v2445
      %v3007 = vsel %vm1515, %v2975, %v2447
      %v3008 = vsel %vm1515, %v2976, %v2449
      %v3009 = vsel %vm1515, %v2977, %v2451
      %v3010 = vsel %vm1515, %v2978, %v2453
      %v3011 = vsel %vm1515, %v2979, %v2455
      %v3012 = vsel %vm1515, %v2980, %v2457
      %v3013 = vsel %vm1515, %v2981, %v2459
      %v3014 = vsel %vm1515, %v2982, %v2461
      %v3015 = vsel %vm1515, %v2983, %v2463
      %v3016 = vsel %vm1515, %v2984, %v2465
      %v3017 = vsel %vm1515, %v2985, %v2467
      %v3018 = vsel %vm1515, %v2986, %v2469
      %v3019 = vsel %vm1515, %v2987, %v2471
      %v3020 = vsel %vm1515, %v2988, %v2473
      %v3021 = vsel %vm1515, %v2989, %v2475
      %v3022 = vsel %vm1515, %v2990, %v2477
      %v3023 = vsel %vm1515, %v2991, %v2479
      %vm3024 = vcmask 326656
      %v3025 = vsel %vm3024, %v2992, %v2513
      %v3026 = vsel %vm3024, %v2993, %v2515
      %v3027 = vsel %vm3024, %v2994, %v2517
      %v3028 = vsel %vm3024, %v2995, %v2519
      %v3029 = vsel %vm3024, %v2996, %v2521
      %v3030 = vsel %vm3024, %v2997, %v2523
      %v3031 = vsel %vm3024, %v2998, %v2525
      %v3032 = vsel %vm3024, %v2999, %v2527
      %v3033 = vsel %vm3024, %v3000, %v2529
      %v3034 = vsel %vm3024, %v3001, %v2531
      %v3035 = vsel %vm3024, %v3002, %v2533
      %v3036 = vsel %vm3024, %v3003, %v2535
      %v3037 = vsel %vm3024, %v3004, %v2537
      %v3038 = vsel %vm3024, %v3005, %v2539
      %v3039 = vsel %vm3024, %v3006, %v2541
      %v3040 = vsel %vm3024, %v3007, %v2543
      %v3041 = vsel %vm3024, %v3008, %v2545
      %v3042 = vsel %vm3024, %v3009, %v2547
      %v3043 = vsel %vm3024, %v3010, %v2549
      %v3044 = vsel %vm3024, %v3011, %v2551
      %v3045 = vsel %vm3024, %v3012, %v2553
      %v3046 = vsel %vm3024, %v3013, %v2555
      %v3047 = vsel %vm3024, %v3014, %v2557
      %v3048 = vsel %vm3024, %v3015, %v2559
      %v3049 = vsel %vm3024, %v3016, %v2561
      %v3050 = vsel %vm3024, %v3017, %v2563
      %v3051 = vsel %vm3024, %v3018, %v2565
      %v3052 = vsel %vm3024, %v3019, %v2567
      %v3053 = vsel %vm3024, %v3020, %v2569
      %v3054 = vsel %vm3024, %v3021, %v2571
      %v3055 = vsel %vm3024, %v3022, %v2573
      %v3056 = vsel %vm3024, %v3023, %v2575
      %vm3057 = vcmask 392192
      %v3058 = vsel %vm3057, %v3025, %v2609
      %v3059 = vsel %vm3057, %v3026, %v2611
      %v3060 = vsel %vm3057, %v3027, %v2613
      %v3061 = vsel %vm3057, %v3028, %v2615
      %v3062 = vsel %vm3057, %v3029, %v2617
      %v3063 = vsel %vm3057, %v3030, %v2619
      %v3064 = vsel %vm3057, %v3031, %v2621
      %v3065 = vsel %vm3057, %v3032, %v2623
      %v3066 = vsel %vm3057, %v3033, %v2625
      %v3067 = vsel %vm3057, %v3034, %v2627
      %v3068 = vsel %vm3057, %v3035, %v2629
      %v3069 = vsel %vm3057, %v3036, %v2631
      %v3070 = vsel %vm3057, %v3037, %v2633
      %v3071 = vsel %vm3057, %v3038, %v2635
      %v3072 = vsel %vm3057, %v3039, %v2637
      %v3073 = vsel %vm3057, %v3040, %v2639
      %v3074 = vsel %vm3057, %v3041, %v2641
      %v3075 = vsel %vm3057, %v3042, %v2643
      %v3076 = vsel %vm3057, %v3043, %v2645
      %v3077 = vsel %vm3057, %v3044, %v2647
      %v3078 = vsel %vm3057, %v3045, %v2649
      %v3079 = vsel %vm3057, %v3046, %v2651
      %v3080 = vsel %vm3057, %v3047, %v2653
      %v3081 = vsel %vm3057, %v3048, %v2655
      %v3082 = vsel %vm3057, %v3049, %v2657
      %v3083 = vsel %vm3057, %v3050, %v2659
      %v3084 = vsel %vm3057, %v3051, %v2661
      %v3085 = vsel %vm3057, %v3052, %v2663
      %v3086 = vsel %vm3057, %v3053, %v2665
      %v3087 = vsel %vm3057, %v3054, %v2667
      %v3088 = vsel %vm3057, %v3055, %v2669
      %v3089 = vsel %vm3057, %v3056, %v2671
      %vm3090 = vcmask 457728
      %v3091 = vsel %vm3090, %v3058, %v2705
      %v3092 = vsel %vm3090, %v3059, %v2707
      %v3093 = vsel %vm3090, %v3060, %v2709
      %v3094 = vsel %vm3090, %v3061, %v2711
      %v3095 = vsel %vm3090, %v3062, %v2713
      %v3096 = vsel %vm3090, %v3063, %v2715
      %v3097 = vsel %vm3090, %v3064, %v2717
      %v3098 = vsel %vm3090, %v3065, %v2719
      %v3099 = vsel %vm3090, %v3066, %v2721
      %v3100 = vsel %vm3090, %v3067, %v2723
      %v3101 = vsel %vm3090, %v3068, %v2725
      %v3102 = vsel %vm3090, %v3069, %v2727
      %v3103 = vsel %vm3090, %v3070, %v2729
      %v3104 = vsel %vm3090, %v3071, %v2731
      %v3105 = vsel %vm3090, %v3072, %v2733
      %v3106 = vsel %vm3090, %v3073, %v2735
      %v3107 = vsel %vm3090, %v3074, %v2737
      %v3108 = vsel %vm3090, %v3075, %v2739
      %v3109 = vsel %vm3090, %v3076, %v2741
      %v3110 = vsel %vm3090, %v3077, %v2743
      %v3111 = vsel %vm3090, %v3078, %v2745
      %v3112 = vsel %vm3090, %v3079, %v2747
      %v3113 = vsel %vm3090, %v3080, %v2749
      %v3114 = vsel %vm3090, %v3081, %v2751
      %v3115 = vsel %vm3090, %v3082, %v2753
      %v3116 = vsel %vm3090, %v3083, %v2755
      %v3117 = vsel %vm3090, %v3084, %v2757
      %v3118 = vsel %vm3090, %v3085, %v2759
      %v3119 = vsel %vm3090, %v3086, %v2761
      %v3120 = vsel %vm3090, %v3087, %v2763
      %v3121 = vsel %vm3090, %v3088, %v2765
      %v3122 = vsel %vm3090, %v3089, %v2767
      %vm3123 = vcmask 523264
      %v3124 = vsel %vm3123, %v3091, %v2801
      %v3125 = vsel %vm3123, %v3092, %v2803
      %v3126 = vsel %vm3123, %v3093, %v2805
      %v3127 = vsel %vm3123, %v3094, %v2807
      %v3128 = vsel %vm3123, %v3095, %v2809
      %v3129 = vsel %vm3123, %v3096, %v2811
      %v3130 = vsel %vm3123, %v3097, %v2813
      %v3131 = vsel %vm3123, %v3098, %v2815
      %v3132 = vsel %vm3123, %v3099, %v2817
      %v3133 = vsel %vm3123, %v3100, %v2819
      %v3134 = vsel %vm3123, %v3101, %v2821
      %v3135 = vsel %vm3123, %v3102, %v2823
      %v3136 = vsel %vm3123, %v3103, %v2825
      %v3137 = vsel %vm3123, %v3104, %v2827
      %v3138 = vsel %vm3123, %v3105, %v2829
      %v3139 = vsel %vm3123, %v3106, %v2831
      %v3140 = vsel %vm3123, %v3107, %v2833
      %v3141 = vsel %vm3123, %v3108, %v2835
      %v3142 = vsel %vm3123, %v3109, %v2837
      %v3143 = vsel %vm3123, %v3110, %v2839
      %v3144 = vsel %vm3123, %v3111, %v2841
      %v3145 = vsel %vm3123, %v3112, %v2843
      %v3146 = vsel %vm3123, %v3113, %v2845
      %v3147 = vsel %vm3123, %v3114, %v2847
      %v3148 = vsel %vm3123, %v3115, %v2849
      %v3149 = vsel %vm3123, %v3116, %v2851
      %v3150 = vsel %vm3123, %v3117, %v2853
      %v3151 = vsel %vm3123, %v3118, %v2855
      %v3152 = vsel %vm3123, %v3119, %v2857
      %v3153 = vsel %vm3123, %v3120, %v2859
      %v3154 = vsel %vm3123, %v3121, %v2861
      %v3155 = vsel %vm3123, %v3122, %v2863
      %v3156 = vpack.c.bf16 %v3125, %v3124
      %v3157 = vpack.c.bf16 %v3127, %v3126
      %v3158 = vpack.c.bf16 %v3129, %v3128
      %v3159 = vpack.c.bf16 %v3131, %v3130
      %v3160 = vpack.c.bf16 %v3133, %v3132
      %v3161 = vpack.c.bf16 %v3135, %v3134
      %v3162 = vpack.c.bf16 %v3137, %v3136
      %v3163 = vpack.c.bf16 %v3139, %v3138
      %v3164 = vpack.c.bf16 %v3141, %v3140
      %v3165 = vpack.c.bf16 %v3143, %v3142
      %v3166 = vpack.c.bf16 %v3145, %v3144
      %v3167 = vpack.c.bf16 %v3147, %v3146
      %v3168 = vpack.c.bf16 %v3149, %v3148
      %v3169 = vpack.c.bf16 %v3151, %v3150
      %v3170 = vpack.c.bf16 %v3153, %v3152
      %v3171 = vpack.c.bf16 %v3155, %v3154
      %v3172 = vld [vmem:[%s3] sm:$0xf]
      %v3173 = vld [vmem:[%s3 + $0x4] sm:$0xf]
      %v3174 = vld [vmem:[%s3 + $0x8] sm:$0xf]
      %v3175 = vld [vmem:[%s3 + $0xc] sm:$0xf]
      %v3176 = vld [vmem:[%s3 + $0x10] sm:$0xf]
      %v3177 = vld [vmem:[%s3 + $0x14] sm:$0xf]
      %v3178 = vld [vmem:[%s3 + $0x18] sm:$0xf]
      %v3179 = vld [vmem:[%s3 + $0x1c] sm:$0xf]
      %v3180 = vld [vmem:[%s3 + $0x20] sm:$0xf]
      %v3181 = vld [vmem:[%s4] sm:$0x1]
      %v3183 = vperm.slane %v3181, 0
      %v3194 = vunpack.c.l.b16 %v3172
      %v3195 = vunpack.c.l.b16 %v3173
      %v3196 = vunpack.c.l.b16 %v3174
      %v3197 = vunpack.c.l.b16 %v3175
      %v3198 = vunpack.c.l.b16 %v3176
      %v3199 = vunpack.c.l.b16 %v3177
      %v3200 = vunpack.c.l.b16 %v3178
      %v3201 = vunpack.c.l.b16 %v3179
      %v3202 = vunpack.c.l.b16 %v3180
      %v3203 = vpack.c.b16 %v3195, %v3194
      %v3204 = vpack.c.b16 %v3197, %v3196
      %v3205 = vpack.c.b16 %v3199, %v3198
      %v3206 = vpack.c.b16 %v3201, %v3200
      %v3207 = vpack.c.b16 %v3202, %v3202
      %vm3212 = vcmask 588800
      %v3214 = vsel %vm3212, %v3156, 0
      %v3217 = vsel %vm3212, %v3157, 0
      %v3220 = vsel %vm3212, %v3158, 0
      %v3223 = vsel %vm3212, %v3159, 0
      %v3226 = vsel %vm3212, %v3160, 0
      %v3229 = vsel %vm3212, %v3161, 0
      %v3232 = vsel %vm3212, %v3162, 0
      %v3235 = vsel %vm3212, %v3163, 0
      %v3238 = vsel %vm3212, %v3164, 0
      %v3241 = vsel %vm3212, %v3165, 0
      %v3244 = vsel %vm3212, %v3166, 0
      %v3247 = vsel %vm3212, %v3167, 0
      %v3250 = vsel %vm3212, %v3168, 0
      %v3253 = vsel %vm3212, %v3169, 0
      %v3256 = vsel %vm3212, %v3170, 0
      %v3259 = vsel %vm3212, %v3171, 0
      %vm3261 = vcmask 1043456
      %v3263 = vsel %vm3261, %v3207, 0
      %3265 = vmatpush.bf16.msra.mxu0 0
      %3266 = vmatpush.bf16.msra.mxu0 0
      %3267 = vmatpush.bf16.msra.mxu0 0
      %3268 = vmatpush.bf16.msra.mxu0 %v3263
      %3269 = vmatpush.bf16.msra.mxu0 %v3206
      %3270 = vmatpush.bf16.msra.mxu0 %v3205
      %3271 = vmatpush.bf16.msra.mxu0 %v3204
      %3272 = vmatpush.bf16.msra.mxu0 %v3203
      %3273 = vmatmul.bf16.gmra.mxu0 %v3214
      %v3274 = vpop.f32.mrf.mxu0
      %v3275 = vadd.f32 %v3183, %v3274
      %v3276 = vpop.f32.mrf.mxu0
      %v3277 = vadd.f32 %v3183, %v3276
      %3278 = vmatmul.bf16.gmra.mxu0 %v3217
      %v3279 = vpop.f32.mrf.mxu0
      %v3280 = vadd.f32 %v3183, %v3279
      %v3281 = vpop.f32.mrf.mxu0
      %v3282 = vadd.f32 %v3183, %v3281
      %3283 = vmatmul.bf16.gmra.mxu0 %v3220
      %v3284 = vpop.f32.mrf.mxu0
      %v3285 = vadd.f32 %v3183, %v3284
      %v3286 = vpop.f32.mrf.mxu0
      %v3287 = vadd.f32 %v3183, %v3286
      %3288 = vmatmul.bf16.gmra.mxu0 %v3223
      %v3289 = vpop.f32.mrf.mxu0
      %v3290 = vadd.f32 %v3183, %v3289
      %v3291 = vpop.f32.mrf.mxu0
      %v3292 = vadd.f32 %v3183, %v3291
      %3293 = vmatmul.bf16.gmra.mxu0 %v3226
      %v3294 = vpop.f32.mrf.mxu0
      %v3295 = vadd.f32 %v3183, %v3294
      %v3296 = vpop.f32.mrf.mxu0
      %v3297 = vadd.f32 %v3183, %v3296
      %3298 = vmatmul.bf16.gmra.mxu0 %v3229
      %v3299 = vpop.f32.mrf.mxu0
      %v3300 = vadd.f32 %v3183, %v3299
      %v3301 = vpop.f32.mrf.mxu0
      %v3302 = vadd.f32 %v3183, %v3301
      %3303 = vmatmul.bf16.gmra.mxu0 %v3232
      %v3304 = vpop.f32.mrf.mxu0
      %v3305 = vadd.f32 %v3183, %v3304
      %v3306 = vpop.f32.mrf.mxu0
      %v3307 = vadd.f32 %v3183, %v3306
      %3308 = vmatmul.bf16.gmra.mxu0 %v3235
      %v3309 = vpop.f32.mrf.mxu0
      %v3310 = vadd.f32 %v3183, %v3309
      %v3311 = vpop.f32.mrf.mxu0
      %v3312 = vadd.f32 %v3183, %v3311
      %3313 = vmatmul.bf16.gmra.mxu0 %v3238
      %v3314 = vpop.f32.mrf.mxu0
      %v3315 = vadd.f32 %v3183, %v3314
      %v3316 = vpop.f32.mrf.mxu0
      %v3317 = vadd.f32 %v3183, %v3316
      %3318 = vmatmul.bf16.gmra.mxu0 %v3241
      %v3319 = vpop.f32.mrf.mxu0
      %v3320 = vadd.f32 %v3183, %v3319
      %v3321 = vpop.f32.mrf.mxu0
      %v3322 = vadd.f32 %v3183, %v3321
      %3323 = vmatmul.bf16.gmra.mxu0 %v3244
      %v3324 = vpop.f32.mrf.mxu0
      %v3325 = vadd.f32 %v3183, %v3324
      %v3326 = vpop.f32.mrf.mxu0
      %v3327 = vadd.f32 %v3183, %v3326
      %3328 = vmatmul.bf16.gmra.mxu0 %v3247
      %v3329 = vpop.f32.mrf.mxu0
      %v3330 = vadd.f32 %v3183, %v3329
      %v3331 = vpop.f32.mrf.mxu0
      %v3332 = vadd.f32 %v3183, %v3331
      %3333 = vmatmul.bf16.gmra.mxu0 %v3250
      %v3334 = vpop.f32.mrf.mxu0
      %v3335 = vadd.f32 %v3183, %v3334
      %v3336 = vpop.f32.mrf.mxu0
      %v3337 = vadd.f32 %v3183, %v3336
      %3338 = vmatmul.bf16.gmra.mxu0 %v3253
      %v3339 = vpop.f32.mrf.mxu0
      %v3340 = vadd.f32 %v3183, %v3339
      %v3341 = vpop.f32.mrf.mxu0
      %v3342 = vadd.f32 %v3183, %v3341
      %3343 = vmatmul.bf16.gmra.mxu0 %v3256
      %v3344 = vpop.f32.mrf.mxu0
      %v3345 = vadd.f32 %v3183, %v3344
      %v3346 = vpop.f32.mrf.mxu0
      %v3347 = vadd.f32 %v3183, %v3346
      %3348 = vmatmul.bf16.gmra.mxu0 %v3259
      %v3349 = vpop.f32.mrf.mxu0
      %v3350 = vadd.f32 %v3183, %v3349
      %v3351 = vpop.f32.mrf.mxu0
      %v3352 = vadd.f32 %v3183, %v3351
      %3353 = vdwg.mxu0
      %3354 = vst [vmem:[%s224] sm:$0xff] %v3275
      %3355 = vst [vmem:[%s224 + $0x8] sm:$0xff] %v3277
      %3356 = vst [vmem:[%s224 + $0x10] sm:$0xff] %v3280
      %3357 = vst [vmem:[%s224 + $0x18] sm:$0xff] %v3282
      %3358 = vst [vmem:[%s224 + $0x20] sm:$0xff] %v3285
      %3359 = vst [vmem:[%s224 + $0x28] sm:$0xff] %v3287
      %3360 = vst [vmem:[%s224 + $0x30] sm:$0xff] %v3290
      %3361 = vst [vmem:[%s224 + $0x38] sm:$0xff] %v3292
      %3362 = vst [vmem:[%s224 + $0x40] sm:$0xff] %v3295
      %3363 = vst [vmem:[%s224 + $0x48] sm:$0xff] %v3297
      %3364 = vst [vmem:[%s224 + $0x50] sm:$0xff] %v3300
      %3365 = vst [vmem:[%s224 + $0x58] sm:$0xff] %v3302
      %3366 = vst [vmem:[%s224 + $0x60] sm:$0xff] %v3305
      %3367 = vst [vmem:[%s224 + $0x68] sm:$0xff] %v3307
      %3368 = vst [vmem:[%s224 + $0x70] sm:$0xff] %v3310
      %3369 = vst [vmem:[%s224 + $0x78] sm:$0xff] %v3312
      %3370 = vst [vmem:[%s224 + $0x80] sm:$0xff] %v3315
      %3371 = vst [vmem:[%s224 + $0x88] sm:$0xff] %v3317
      %3372 = vst [vmem:[%s224 + $0x90] sm:$0xff] %v3320
      %3373 = vst [vmem:[%s224 + $0x98] sm:$0xff] %v3322
      %3374 = vst [vmem:[%s224 + $0xa0] sm:$0xff] %v3325
      %3375 = vst [vmem:[%s224 + $0xa8] sm:$0xff] %v3327
      %3376 = vst [vmem:[%s224 + $0xb0] sm:$0xff] %v3330
      %3377 = vst [vmem:[%s224 + $0xb8] sm:$0xff] %v3332
      %3378 = vst [vmem:[%s224 + $0xc0] sm:$0xff] %v3335
      %3379 = vst [vmem:[%s224 + $0xc8] sm:$0xff] %v3337
      %3380 = vst [vmem:[%s224 + $0xd0] sm:$0xff] %v3340
      %3381 = vst [vmem:[%s224 + $0xd8] sm:$0xff] %v3342
      %3382 = vst [vmem:[%s224 + $0xe0] sm:$0xff] %v3345
      %3383 = vst [vmem:[%s224 + $0xe8] sm:$0xff] %v3347
      %3384 = vst [vmem:[%s224 + $0xf0] sm:$0xff] %v3350
      %3385 = vst [vmem:[%s224 + $0xf8] sm:$0xff] %v3352
      %p3386 = scmp.lt.s32.totalorder %s16, 1
      %s3387 = scalar_select %p3386, %s16, 1
      %s3388 = smul.addr %s3387, 32
      %s3389 = smul.addr %s3388, 8
      %s3390 = scalar_lea.vmem %s5, %s3389
      // Predicated region
      $region41: #{input_block_forward.1} parent=39 // pred_check
        %p3391 = pneg %p144
      $region42: #{input_block_forward.1} parent=39 // pred_check_branch
        %3393 = sbr.rel (%p3391) target = $region44
      $region43: #{input_block_forward.1} parent=39 // pred_region
        _
      $region44: #{input_block_forward.1} parent=39 // pred_fallthru
        _
    $region40: #{input_block_forward.1} parent=5 // pred_fallthru
      _
    %p3394 = scmp.le.s32.totalorder 2, %s11
    // Predicated region
    $region45: #{input_block_forward.1} parent=5 // pred_check
      %p3395 = pneg %p3394
    $region46: #{input_block_forward.1} parent=5 // pred_check_branch
      %3397 = sbr.rel (%p3395) target = $region48
    $region47: #{input_block_forward.1} parent=5 // pred_region
      %s3398 = ssub.s32 %s11, 2
      // Predicated region
      $region49: #{input_block_forward.1} parent=47 // pred_check
        %p3399 = pneg %p150
      $region50: #{input_block_forward.1} parent=47 // pred_check_branch
        %3401 = sbr.rel (%p3399) target = $region52
      $region51: #{input_block_forward.1} parent=47 // pred_region
        %p3402 = scmp.lt.s32.totalorder %s17, 1
        %s3403 = scalar_select %p3402, %s17, 1
        %s3404 = smul.addr %s3403, 32
        %s3405 = smul.addr %s3404, 8
        %s3406 = scalar_lea.vmem %s5, %s3405
      $region52: #{input_block_forward.1} parent=47 // pred_fallthru
        _
    $region48: #{input_block_forward.1} parent=5 // pred_fallthru
      _
  $region6: #{input_block_forward.1} parent=0 // loop_footer
    %s15 = sadd.s32 1, %s11
  $region7: #{input_block_forward.1} parent=0 // loop_footer_branch
    %10 = sbr.rel target = $region3
  $region8: #{input_block_forward.1} parent=0 // loop_exit
    _

</llo_original>
